<compile_context>
chip_gen: v5e
topology: v5e:2x2
jax: 0.10.0
libtpu: 0.0.40
codegen_flags: <defaults>
</compile_context>

<pallas_src>
import functools

import numpy as np
import jax
import jax.numpy as jnp
from jax import lax
from jax.experimental import pallas as pl
from jax.experimental.pallas import tpu as pltpu


def _round_up(x, m):
    return (x + m - 1) // m * m


def _axis_weights(P, S, n_samples, roi_start, bin_size, *, transposed):
    """Accumulated 1-D bilinear interpolation weights along one spatial axis.

    Returns a (P, S) matrix (or (S, P) if transposed) with
      weight[p, s] = (1/n) * sum_i valid_i * bilinear(sample_{p,i}, s)
    where sample_{p,i} = roi_start + p*bin_size + (i+0.5)*bin_size/n.
    (Exact float equality `s == low/high` is safe: indices are small integral f32.)
    """
    shape = (S, P) if transposed else (P, S)
    p_dim = 1 if transposed else 0
    s_dim = 1 - p_dim
    p = lax.broadcasted_iota(jnp.int32, shape, p_dim).astype(jnp.float32)
    s = lax.broadcasted_iota(jnp.int32, shape, s_dim).astype(jnp.float32)

    size_f = float(S)
    acc = jnp.zeros(shape, jnp.float32)
    # Static sample loop (sampling_ratio > 0).
    for i in range(n_samples):
        coord = roi_start + p * bin_size + (i + 0.5) * bin_size / n_samples
        valid = (coord >= -1.0) & (coord <= size_f)
        c = jnp.clip(coord, 0.0, size_f)
        low0 = jnp.floor(c)
        clamp = low0 >= (size_f - 1.0)
        low = jnp.where(clamp, size_f - 1.0, low0)
        high = jnp.where(clamp, size_f - 1.0, low0 + 1.0)
        c_eff = jnp.where(clamp, size_f - 1.0, c)
        l = c_eff - low
        h = 1.0 - l
        contrib = jnp.where(s == low, h, 0.0) + jnp.where(s == high, l, 0.0)
        acc = acc + jnp.where(valid, contrib, 0.0)
    return acc * (1.0 / float(n_samples))


def _roi_align_kernel(gidx_ref, rois_ref, feat_ref, out_ref, *,
                      spatial_scale, sampling_ratio, aligned):
    """One grid step == (one channel tile, one group of R ROIs of one image).

    gidx_ref : SMEM (G,)       int32  per-group image index (used by index_maps)
    rois_ref : SMEM (5, B_pad) f32    padded ROI table [bidx, x1, y1, x2, y2]
    feat_ref : VMEM (1, TC, H, W)     channel tile of this group's image
    out_ref  : VMEM (R, TC, PH, PW)
    """
    del gidx_ref  # only consumed by the index_maps
    g = pl.program_id(1)
    off = 0.5 if aligned else 0.0

    f = feat_ref[0]                               # (TC, H, W)
    TC, H, W = f.shape
    R, _, PH, PW = out_ref.shape

    # --- per-ROI separable bilinear weights (tiny: (PH,H) and (W,PW)) ---------
    wy_list, wxt_list = [], []
    for r in range(R):                            # static unroll over the ROI group
        idx = g * R + r
        x1 = rois_ref[1, idx] * spatial_scale - off
        y1 = rois_ref[2, idx] * spatial_scale - off
        x2 = rois_ref[3, idx] * spatial_scale - off
        y2 = rois_ref[4, idx] * spatial_scale - off
        roi_w = x2 - x1
        roi_h = y2 - y1
        if not aligned:                           # legacy Detectron: force >= 1x1 ROI
            roi_w = jnp.maximum(roi_w, 1.0)
            roi_h = jnp.maximum(roi_h, 1.0)
        wy_list.append(_axis_weights(PH, H, sampling_ratio, y1, roi_h / PH,
                                     transposed=False))   # (PH, H)
        wxt_list.append(_axis_weights(PW, W, sampling_ratio, x1, roi_w / PW,
                                      transposed=True))    # (W, PW)
    wy_all = jnp.concatenate(wy_list, axis=0)               # (R*PH, H)

    # --- H-contraction for all R ROIs at once, batched over the channel tile --
    # Per channel: one (R*PH, H) @ (H, W) MXU matmul (R x better row fill and
    # R x fewer MXU ops than one matmul per ROI).
    wy_b = jnp.broadcast_to(wy_all[None], (TC, R * PH, H)).astype(f.dtype)
    tmp = jnp.einsum('cqh,chw->cqw', wy_b, f,
                     preferred_element_type=jnp.float32)    # (TC, R*PH, W) f32

    # --- W-contraction per ROI (second, ~PW/H-times-smaller contraction) ------
    for r in range(R):                            # static unroll
        tmp_r = tmp[:, r * PH:(r + 1) * PH, :]               # (TC, PH, W)
        wxt_b = jnp.broadcast_to(wxt_list[r][None], (TC, W, PW))
        out_r = jnp.einsum('cyw,cwx->cyx', tmp_r, wxt_b,
                           preferred_element_type=jnp.float32)  # (TC, PH, PW)
        out_ref[r] = out_r.astype(out_ref.dtype)


def _choose_channel_tile(C, H, W, PH, PW, R, feat_itemsize, vmem_cap):
    """Largest channel tile whose *padded, double-buffered* footprint fits VMEM.

    Accounts for sublane/lane padding of the NCHW blocks (W padded to 128,
    second-minor dims padded to 8), double buffering of the pipelined blocks,
    and the in-kernel intermediates (broadcast weights + H-contracted tile).
    """
    def footprint(tc):
        feat_blk = tc * _round_up(H, 8) * _round_up(W, 128) * feat_itemsize
        out_blk = R * tc * _round_up(PH, 8) * _round_up(PW, 128) * 4
        wy_b = tc * _round_up(R * PH, 8) * _round_up(H, 128) * 4
        tmp = tc * _round_up(R * PH, 8) * _round_up(W, 128) * 4
        wxt_b = tc * _round_up(W, 8) * _round_up(PW, 128) * 4
        slack = 2 << 20
        return 2 * feat_blk + 2 * out_blk + wy_b + tmp + wxt_b + slack

    limit = int(vmem_cap * 0.7)
    for tc in sorted((d for d in range(1, C + 1) if C % d == 0), reverse=True):
        if footprint(tc) <= limit:
            return tc, footprint(tc)
    return 1, footprint(1)          # best effort


def roi_align_tpu(feat_nchw, rois, output_size, spatial_scale, sampling_ratio,
                  aligned=True, *, roi_block=8, feature_dtype=None):
    """Pallas ROIAlign forward.  feat_nchw: (N,C,H,W), rois: (B,5) -> (B,C,PH,PW)."""
    if rois.ndim != 2 or rois.shape[1] != 5:
        raise ValueError('Expected rois.dim() == 2 and rois.size(1) == 5')
    if sampling_ratio <= 0:
        # TODO(synk): sampling_ratio==0 (adaptive ceil(roi/bin) sample grid) needs
        # dynamic per-ROI loop bounds; not supported by this static-sample kernel.
        raise NotImplementedError("sampling_ratio must be > 0 for the Pallas kernel")

    N, C, H, W = map(int, feat_nchw.shape)
    if isinstance(output_size, (tuple, list)):
        PH, PW = int(output_size[0]), int(output_size[1])
    else:
        PH = PW = int(output_size)
    B = int(rois.shape[0])

    # Module calls .float(); keep f32 by default for exact parity.  Passing
    # feature_dtype=jnp.bfloat16 halves the dominant HBM feature stream
    # (~1e-3 relative error), most valuable on bandwidth-limited v5e.
    compute_dtype = jnp.float32 if feature_dtype is None else feature_dtype
    feat = feat_nchw.astype(compute_dtype)
    rois = rois.astype(jnp.float32)

    R = max(1, min(int(roi_block), B))            # ROIs per grid step

    try:
        vmem_cap = int(pltpu.get_tpu_info().vmem_capacity_bytes)
    except Exception:                             # unknown HW -> size for 64 MiB (v7x)
        vmem_cap = 64 * 1024 * 1024
    itemsize = int(jnp.dtype(compute_dtype).itemsize)
    TC, vmem_need = _choose_channel_tile(C, H, W, PH, PW, R, itemsize, vmem_cap)
    nc = C // TC

    # ---- sort ROIs by image and pad each image's group to a multiple of R ----
    # (clamp the batch index so a bad ROI can never address an OOB feature block)
    bidx = jnp.clip(rois[:, 0].astype(jnp.int32), 0, N - 1)
    order = jnp.argsort(bidx)
    inv_order = jnp.argsort(order)
    bidx_s = jnp.take(bidx, order)
    rois_s = jnp.take(rois, order, axis=0)

    counts = jnp.bincount(bidx_s, length=N).astype(jnp.int32)          # ROIs / image
    starts = jnp.concatenate([jnp.zeros((1,), jnp.int32), jnp.cumsum(counts)[:-1]])
    rank = jnp.arange(B, dtype=jnp.int32) - starts[bidx_s]             # rank in image
    padded_counts = ((counts + R - 1) // R) * R
    padded_starts = jnp.concatenate([jnp.zeros((1,), jnp.int32),
                                     jnp.cumsum(padded_counts)[:-1]])
    pos = padded_starts[bidx_s] + rank            # padded slot of each sorted ROI

    B_pad = int(-(-(B + min(N, B) * (R - 1)) // R) * R)   # static worst case
    G = B_pad // R

    rois_pad = jnp.zeros((B_pad, 5), jnp.float32).at[pos].set(rois_s)
    bidx_pad = jnp.zeros((B_pad,), jnp.int32).at[pos].set(bidx_s)
    gidx = bidx_pad[::R]                          # image index per ROI group (G,)
    rois_smem = rois_pad.T                        # (5, B_pad): long axis last in SMEM

    kernel = functools.partial(
        _roi_align_kernel,
        spatial_scale=float(spatial_scale),
        sampling_ratio=int(sampling_ratio),
        aligned=bool(aligned))

    # Advisory cost: two chained contractions per ROI; feature bytes reflect the
    # per-image reuse obtained from the sorted/inner ROI-group grid axis.
    flops = 2.0 * B_pad * C * PH * W * (H + PW)
    bytes_accessed = (N * C * H * W * itemsize            # features, one pass
                      + B_pad * C * PH * PW * 4            # outputs
                      + B_pad * 5 * 4 + G * 4)             # ROI table + group index
    cost = pl.CostEstimate(flops=int(flops), transcendentals=0,
                           bytes_accessed=int(bytes_accessed))

    vmem_limit = int(min(vmem_cap * 0.9, max(1.5 * vmem_need, 32 << 20)))

    out_pad = pl.pallas_call(
        kernel,
        out_shape=jax.ShapeDtypeStruct((B_pad, C, PH, PW), jnp.float32),
        grid_spec=pltpu.PrefetchScalarGridSpec(
            num_scalar_prefetch=2,                # gidx, rois_smem -> SMEM
            grid=(nc, G),                         # channel tile OUTER, ROI group INNER
            in_specs=[
                pl.BlockSpec((1, TC, H, W),
                             lambda ci, g, gidx, rois: (gidx[g], ci, 0, 0)),
            ],
            out_specs=pl.BlockSpec((R, TC, PH, PW),
                                   lambda ci, g, gidx, rois: (g, ci, 0, 0)),
        ),
        compiler_params=pltpu.CompilerParams(
            dimension_semantics=("arbitrary", "parallel"),
            vmem_limit_bytes=vmem_limit),
        cost_estimate=cost,
    )(gidx, rois_smem, feat)

    # Gather the real ROIs back into their original order.
    return jnp.take(out_pad, jnp.take(pos, inv_order), axis=0)   # (B, C, PH, PW)


def roi_align_ref(feat, rois, out_size, spatial_scale, sampling_ratio, aligned):
    """Pure-numpy reference (standard roi_align semantics)."""
    feat = np.asarray(feat, np.float32)
    rois = np.asarray(rois, np.float32)
    N, C, H, W = feat.shape
    PH, PW = out_size
    B = rois.shape[0]
    out = np.zeros((B, C, PH, PW), np.float32)
    off = 0.5 if aligned else 0.0
    for b in range(B):
        n = int(rois[b, 0])
        sw = rois[b, 1] * spatial_scale - off
        sh = rois[b, 2] * spatial_scale - off
        ew = rois[b, 3] * spatial_scale - off
        eh = rois[b, 4] * spatial_scale - off
        rw, rh = ew - sw, eh - sh
        if not aligned:
            rw, rh = max(rw, 1.0), max(rh, 1.0)
        bh, bw = rh / PH, rw / PW
        gh = sampling_ratio if sampling_ratio > 0 else int(np.ceil(rh / PH))
        gw = sampling_ratio if sampling_ratio > 0 else int(np.ceil(rw / PW))
        count = max(gh * gw, 1)
        for ph in range(PH):
            for pw in range(PW):
                acc = np.zeros((C,), np.float32)
                for iy in range(gh):
                    y = sh + ph * bh + (iy + 0.5) * bh / gh
                    for ix in range(gw):
                        x = sw + pw * bw + (ix + 0.5) * bw / gw
                        if y < -1.0 or y > H or x < -1.0 or x > W:
                            continue
                        yy, xx = max(y, 0.0), max(x, 0.0)
                        yl, xl = int(yy), int(xx)
                        if yl >= H - 1:
                            yh = yl = H - 1
                            yy = float(yl)
                        else:
                            yh = yl + 1
                        if xl >= W - 1:
                            xh = xl = W - 1
                            xx = float(xl)
                        else:
                            xh = xl + 1
                        ly, lx = yy - yl, xx - xl
                        hy, hx = 1 - ly, 1 - lx
                        acc += (hy * hx * feat[n, :, yl, xl]
                                + hy * lx * feat[n, :, yl, xh]
                                + ly * hx * feat[n, :, yh, xl]
                                + ly * lx * feat[n, :, yh, xh])
                out[b, :, ph, pw] = acc / count
    return out


if __name__ == "__main__":
    key = jax.random.PRNGKey(0)
    N, C, H, W = 2, 4, 16, 16
    output_size = (7, 7)
    spatial_scale = 0.25
    sampling_ratio = 2
    aligned = True

    feat = jax.random.normal(key, (N, C, H, W), dtype=jnp.float32)
    # rois: [batch_index, x1, y1, x2, y2] in input-image coordinates
    rois = jnp.array([
        [0.0, 4.0, 4.0, 40.0, 40.0],
        [1.0, 0.0, 0.0, 63.0, 63.0],
        [0.0, 10.5, 8.25, 50.75, 30.0],
    ], dtype=jnp.float32)

    out = roi_align_tpu(feat, rois, output_size, spatial_scale, sampling_ratio,
                        aligned)
    out = jax.block_until_ready(out)

    ref = roi_align_ref(np.asarray(feat), np.asarray(rois), output_size,
                        spatial_scale, sampling_ratio, aligned)
    assert out.shape == (rois.shape[0], C, output_size[0], output_size[1])
    np.testing.assert_allclose(np.asarray(out), ref, rtol=1e-4, atol=1e-4)
    print("KERNEL_OK")
</pallas_src>

<mosaic_0001>
module attributes {stable_mosaic.version = 11 : i64} {
  func.func @_roi_align_kernel(%arg0: i32, %arg1: i32, %arg2: memref<3xi32, #tpu.memory_space<smem>>, %arg3: memref<5x9xf32, #tpu.memory_space<smem>>, %arg4: memref<1x4x16x16xf32, #tpu.memory_space<vmem>>, %arg5: memref<3x4x7x7xf32, #tpu.memory_space<vmem>>) attributes {dimension_semantics = [#tpu.dimension_semantics<arbitrary>, #tpu.dimension_semantics<parallel>], iteration_bounds = array<i64: 1, 3>, scalar_prefetch = 2 : i64, scratch_operands = 0 : i64, tpu.core_type = #tpu.core_type<tc>, window_params = [{transform_indices = @transform_0, window_bounds = array<i64: 1, 4, 16, 16>}, {transform_indices = @transform_1, window_bounds = array<i64: 3, 4, 7, 7>}]} {
    %c0 = arith.constant 0 : index
    %c0_0 = arith.constant 0 : index
    %c0_1 = arith.constant 0 : index
    %c0_2 = arith.constant 0 : index
    %0 = vector.load %arg4[%c0, %c0_0, %c0_1, %c0_2] : memref<1x4x16x16xf32, #tpu.memory_space<vmem>>, vector<1x4x16x16xf32>
    %1 = vector.shape_cast %0 : vector<1x4x16x16xf32> to vector<4x16x16xf32>
    %c3_i32 = arith.constant 3 : i32
    %2 = arith.muli %arg1, %c3_i32 : i32
    %c0_i32 = arith.constant 0 : i32
    %3 = arith.addi %2, %c0_i32 : i32
    %c1 = arith.constant 1 : index
    %4 = arith.index_cast %3 : i32 to index
    %5 = memref.load %arg3[%c1, %4] : memref<5x9xf32, #tpu.memory_space<smem>>
    %cst = arith.constant 2.500000e-01 : f32
    %6 = arith.mulf %5, %cst : f32
    %cst_3 = arith.constant 5.000000e-01 : f32
    %7 = arith.subf %6, %cst_3 : f32
    %c2 = arith.constant 2 : index
    %8 = arith.index_cast %3 : i32 to index
    %9 = memref.load %arg3[%c2, %8] : memref<5x9xf32, #tpu.memory_space<smem>>
    %cst_4 = arith.constant 2.500000e-01 : f32
    %10 = arith.mulf %9, %cst_4 : f32
    %cst_5 = arith.constant 5.000000e-01 : f32
    %11 = arith.subf %10, %cst_5 : f32
    %c3 = arith.constant 3 : index
    %12 = arith.index_cast %3 : i32 to index
    %13 = memref.load %arg3[%c3, %12] : memref<5x9xf32, #tpu.memory_space<smem>>
    %cst_6 = arith.constant 2.500000e-01 : f32
    %14 = arith.mulf %13, %cst_6 : f32
    %cst_7 = arith.constant 5.000000e-01 : f32
    %15 = arith.subf %14, %cst_7 : f32
    %c4 = arith.constant 4 : index
    %16 = arith.index_cast %3 : i32 to index
    %17 = memref.load %arg3[%c4, %16] : memref<5x9xf32, #tpu.memory_space<smem>>
    %cst_8 = arith.constant 2.500000e-01 : f32
    %18 = arith.mulf %17, %cst_8 : f32
    %cst_9 = arith.constant 5.000000e-01 : f32
    %19 = arith.subf %18, %cst_9 : f32
    %20 = arith.subf %15, %7 : f32
    %21 = arith.subf %19, %11 : f32
    %cst_10 = arith.constant 7.000000e+00 : f32
    %22 = arith.divf %21, %cst_10 : f32
    %23 = tpu.iota {dimensions = array<i32: 0>} : vector<7x16xi32>
    %24 = arith.sitofp %23 : vector<7x16xi32> to vector<7x16xf32>
    %25 = tpu.iota {dimensions = array<i32: 1>} : vector<7x16xi32>
    %26 = arith.sitofp %25 : vector<7x16xi32> to vector<7x16xf32>
    %cst_11 = arith.constant 0.000000e+00 : f32
    %27 = vector.broadcast %cst_11 : f32 to vector<7x16xf32>
    %28 = vector.broadcast %22 : f32 to vector<7x16xf32>
    %29 = arith.mulf %24, %28 : vector<7x16xf32>
    %30 = vector.broadcast %11 : f32 to vector<7x16xf32>
    %31 = arith.addf %30, %29 : vector<7x16xf32>
    %cst_12 = arith.constant 5.000000e-01 : f32
    %32 = arith.mulf %cst_12, %22 : f32
    %cst_13 = arith.constant 2.000000e+00 : f32
    %33 = arith.divf %32, %cst_13 : f32
    %34 = vector.broadcast %33 : f32 to vector<7x16xf32>
    %35 = arith.addf %31, %34 : vector<7x16xf32>
    %cst_14 = arith.constant -1.000000e+00 : f32
    %36 = vector.broadcast %cst_14 : f32 to vector<7x16xf32>
    %37 = arith.cmpf oge, %35, %36 : vector<7x16xf32>
    %cst_15 = arith.constant 1.600000e+01 : f32
    %38 = vector.broadcast %cst_15 : f32 to vector<7x16xf32>
    %39 = arith.cmpf ole, %35, %38 : vector<7x16xf32>
    %40 = arith.andi %37, %39 : vector<7x16xi1>
    %cst_16 = arith.constant 0.000000e+00 : f32
    %cst_17 = arith.constant 1.600000e+01 : f32
    %41 = vector.broadcast %cst_16 : f32 to vector<7x16xf32>
    %42 = arith.maximumf %41, %35 : vector<7x16xf32>
    %43 = vector.broadcast %cst_17 : f32 to vector<7x16xf32>
    %44 = arith.minimumf %43, %42 : vector<7x16xf32>
    %45 = math.floor %44 : vector<7x16xf32>
    %cst_18 = arith.constant 1.500000e+01 : f32
    %46 = vector.broadcast %cst_18 : f32 to vector<7x16xf32>
    %47 = arith.cmpf oge, %45, %46 : vector<7x16xf32>
    %cst_19 = arith.constant 1.500000e+01 : f32
    %48 = vector.broadcast %cst_19 : f32 to vector<7x16xf32>
    %49 = arith.select %47, %48, %45 : vector<7x16xi1>, vector<7x16xf32>
    %cst_20 = arith.constant 1.000000e+00 : f32
    %50 = vector.broadcast %cst_20 : f32 to vector<7x16xf32>
    %51 = arith.addf %45, %50 : vector<7x16xf32>
    %cst_21 = arith.constant 1.500000e+01 : f32
    %52 = vector.broadcast %cst_21 : f32 to vector<7x16xf32>
    %53 = arith.select %47, %52, %51 : vector<7x16xi1>, vector<7x16xf32>
    %cst_22 = arith.constant 1.500000e+01 : f32
    %54 = vector.broadcast %cst_22 : f32 to vector<7x16xf32>
    %55 = arith.select %47, %54, %44 : vector<7x16xi1>, vector<7x16xf32>
    %56 = arith.subf %55, %49 : vector<7x16xf32>
    %cst_23 = arith.constant 1.000000e+00 : f32
    %57 = vector.broadcast %cst_23 : f32 to vector<7x16xf32>
    %58 = arith.subf %57, %56 : vector<7x16xf32>
    %59 = arith.cmpf oeq, %26, %49 : vector<7x16xf32>
    %cst_24 = arith.constant 0.000000e+00 : f32
    %60 = vector.broadcast %cst_24 : f32 to vector<7x16xf32>
    %61 = arith.select %59, %58, %60 : vector<7x16xi1>, vector<7x16xf32>
    %62 = arith.cmpf oeq, %26, %53 : vector<7x16xf32>
    %cst_25 = arith.constant 0.000000e+00 : f32
    %63 = vector.broadcast %cst_25 : f32 to vector<7x16xf32>
    %64 = arith.select %62, %56, %63 : vector<7x16xi1>, vector<7x16xf32>
    %65 = arith.addf %61, %64 : vector<7x16xf32>
    %cst_26 = arith.constant 0.000000e+00 : f32
    %66 = vector.broadcast %cst_26 : f32 to vector<7x16xf32>
    %67 = arith.select %40, %65, %66 : vector<7x16xi1>, vector<7x16xf32>
    %68 = arith.addf %27, %67 : vector<7x16xf32>
    %69 = vector.broadcast %22 : f32 to vector<7x16xf32>
    %70 = arith.mulf %24, %69 : vector<7x16xf32>
    %71 = vector.broadcast %11 : f32 to vector<7x16xf32>
    %72 = arith.addf %71, %70 : vector<7x16xf32>
    %cst_27 = arith.constant 1.500000e+00 : f32
    %73 = arith.mulf %cst_27, %22 : f32
    %cst_28 = arith.constant 2.000000e+00 : f32
    %74 = arith.divf %73, %cst_28 : f32
    %75 = vector.broadcast %74 : f32 to vector<7x16xf32>
    %76 = arith.addf %72, %75 : vector<7x16xf32>
    %cst_29 = arith.constant -1.000000e+00 : f32
    %77 = vector.broadcast %cst_29 : f32 to vector<7x16xf32>
    %78 = arith.cmpf oge, %76, %77 : vector<7x16xf32>
    %cst_30 = arith.constant 1.600000e+01 : f32
    %79 = vector.broadcast %cst_30 : f32 to vector<7x16xf32>
    %80 = arith.cmpf ole, %76, %79 : vector<7x16xf32>
    %81 = arith.andi %78, %80 : vector<7x16xi1>
    %cst_31 = arith.constant 0.000000e+00 : f32
    %cst_32 = arith.constant 1.600000e+01 : f32
    %82 = vector.broadcast %cst_31 : f32 to vector<7x16xf32>
    %83 = arith.maximumf %82, %76 : vector<7x16xf32>
    %84 = vector.broadcast %cst_32 : f32 to vector<7x16xf32>
    %85 = arith.minimumf %84, %83 : vector<7x16xf32>
    %86 = math.floor %85 : vector<7x16xf32>
    %cst_33 = arith.constant 1.500000e+01 : f32
    %87 = vector.broadcast %cst_33 : f32 to vector<7x16xf32>
    %88 = arith.cmpf oge, %86, %87 : vector<7x16xf32>
    %cst_34 = arith.constant 1.500000e+01 : f32
    %89 = vector.broadcast %cst_34 : f32 to vector<7x16xf32>
    %90 = arith.select %88, %89, %86 : vector<7x16xi1>, vector<7x16xf32>
    %cst_35 = arith.constant 1.000000e+00 : f32
    %91 = vector.broadcast %cst_35 : f32 to vector<7x16xf32>
    %92 = arith.addf %86, %91 : vector<7x16xf32>
    %cst_36 = arith.constant 1.500000e+01 : f32
    %93 = vector.broadcast %cst_36 : f32 to vector<7x16xf32>
    %94 = arith.select %88, %93, %92 : vector<7x16xi1>, vector<7x16xf32>
    %cst_37 = arith.constant 1.500000e+01 : f32
    %95 = vector.broadcast %cst_37 : f32 to vector<7x16xf32>
    %96 = arith.select %88, %95, %85 : vector<7x16xi1>, vector<7x16xf32>
    %97 = arith.subf %96, %90 : vector<7x16xf32>
    %cst_38 = arith.constant 1.000000e+00 : f32
    %98 = vector.broadcast %cst_38 : f32 to vector<7x16xf32>
    %99 = arith.subf %98, %97 : vector<7x16xf32>
    %100 = arith.cmpf oeq, %26, %90 : vector<7x16xf32>
    %cst_39 = arith.constant 0.000000e+00 : f32
    %101 = vector.broadcast %cst_39 : f32 to vector<7x16xf32>
    %102 = arith.select %100, %99, %101 : vector<7x16xi1>, vector<7x16xf32>
    %103 = arith.cmpf oeq, %26, %94 : vector<7x16xf32>
    %cst_40 = arith.constant 0.000000e+00 : f32
    %104 = vector.broadcast %cst_40 : f32 to vector<7x16xf32>
    %105 = arith.select %103, %97, %104 : vector<7x16xi1>, vector<7x16xf32>
    %106 = arith.addf %102, %105 : vector<7x16xf32>
    %cst_41 = arith.constant 0.000000e+00 : f32
    %107 = vector.broadcast %cst_41 : f32 to vector<7x16xf32>
    %108 = arith.select %81, %106, %107 : vector<7x16xi1>, vector<7x16xf32>
    %109 = arith.addf %68, %108 : vector<7x16xf32>
    %cst_42 = arith.constant 5.000000e-01 : f32
    %110 = vector.broadcast %cst_42 : f32 to vector<7x16xf32>
    %111 = arith.mulf %109, %110 : vector<7x16xf32>
    %cst_43 = arith.constant 7.000000e+00 : f32
    %112 = arith.divf %20, %cst_43 : f32
    %113 = tpu.iota {dimensions = array<i32: 1>} : vector<16x7xi32>
    %114 = arith.sitofp %113 : vector<16x7xi32> to vector<16x7xf32>
    %115 = tpu.iota {dimensions = array<i32: 0>} : vector<16x7xi32>
    %116 = arith.sitofp %115 : vector<16x7xi32> to vector<16x7xf32>
    %cst_44 = arith.constant 0.000000e+00 : f32
    %117 = vector.broadcast %cst_44 : f32 to vector<16x7xf32>
    %118 = vector.broadcast %112 : f32 to vector<16x7xf32>
    %119 = arith.mulf %114, %118 : vector<16x7xf32>
    %120 = vector.broadcast %7 : f32 to vector<16x7xf32>
    %121 = arith.addf %120, %119 : vector<16x7xf32>
    %cst_45 = arith.constant 5.000000e-01 : f32
    %122 = arith.mulf %cst_45, %112 : f32
    %cst_46 = arith.constant 2.000000e+00 : f32
    %123 = arith.divf %122, %cst_46 : f32
    %124 = vector.broadcast %123 : f32 to vector<16x7xf32>
    %125 = arith.addf %121, %124 : vector<16x7xf32>
    %cst_47 = arith.constant -1.000000e+00 : f32
    %126 = vector.broadcast %cst_47 : f32 to vector<16x7xf32>
    %127 = arith.cmpf oge, %125, %126 : vector<16x7xf32>
    %cst_48 = arith.constant 1.600000e+01 : f32
    %128 = vector.broadcast %cst_48 : f32 to vector<16x7xf32>
    %129 = arith.cmpf ole, %125, %128 : vector<16x7xf32>
    %130 = arith.andi %127, %129 : vector<16x7xi1>
    %cst_49 = arith.constant 0.000000e+00 : f32
    %cst_50 = arith.constant 1.600000e+01 : f32
    %131 = vector.broadcast %cst_49 : f32 to vector<16x7xf32>
    %132 = arith.maximumf %131, %125 : vector<16x7xf32>
    %133 = vector.broadcast %cst_50 : f32 to vector<16x7xf32>
    %134 = arith.minimumf %133, %132 : vector<16x7xf32>
    %135 = math.floor %134 : vector<16x7xf32>
    %cst_51 = arith.constant 1.500000e+01 : f32
    %136 = vector.broadcast %cst_51 : f32 to vector<16x7xf32>
    %137 = arith.cmpf oge, %135, %136 : vector<16x7xf32>
    %cst_52 = arith.constant 1.500000e+01 : f32
    %138 = vector.broadcast %cst_52 : f32 to vector<16x7xf32>
    %139 = arith.select %137, %138, %135 : vector<16x7xi1>, vector<16x7xf32>
    %cst_53 = arith.constant 1.000000e+00 : f32
    %140 = vector.broadcast %cst_53 : f32 to vector<16x7xf32>
    %141 = arith.addf %135, %140 : vector<16x7xf32>
    %cst_54 = arith.constant 1.500000e+01 : f32
    %142 = vector.broadcast %cst_54 : f32 to vector<16x7xf32>
    %143 = arith.select %137, %142, %141 : vector<16x7xi1>, vector<16x7xf32>
    %cst_55 = arith.constant 1.500000e+01 : f32
    %144 = vector.broadcast %cst_55 : f32 to vector<16x7xf32>
    %145 = arith.select %137, %144, %134 : vector<16x7xi1>, vector<16x7xf32>
    %146 = arith.subf %145, %139 : vector<16x7xf32>
    %cst_56 = arith.constant 1.000000e+00 : f32
    %147 = vector.broadcast %cst_56 : f32 to vector<16x7xf32>
    %148 = arith.subf %147, %146 : vector<16x7xf32>
    %149 = arith.cmpf oeq, %116, %139 : vector<16x7xf32>
    %cst_57 = arith.constant 0.000000e+00 : f32
    %150 = vector.broadcast %cst_57 : f32 to vector<16x7xf32>
    %151 = arith.select %149, %148, %150 : vector<16x7xi1>, vector<16x7xf32>
    %152 = arith.cmpf oeq, %116, %143 : vector<16x7xf32>
    %cst_58 = arith.constant 0.000000e+00 : f32
    %153 = vector.broadcast %cst_58 : f32 to vector<16x7xf32>
    %154 = arith.select %152, %146, %153 : vector<16x7xi1>, vector<16x7xf32>
    %155 = arith.addf %151, %154 : vector<16x7xf32>
    %cst_59 = arith.constant 0.000000e+00 : f32
    %156 = vector.broadcast %cst_59 : f32 to vector<16x7xf32>
    %157 = arith.select %130, %155, %156 : vector<16x7xi1>, vector<16x7xf32>
    %158 = arith.addf %117, %157 : vector<16x7xf32>
    %159 = vector.broadcast %112 : f32 to vector<16x7xf32>
    %160 = arith.mulf %114, %159 : vector<16x7xf32>
    %161 = vector.broadcast %7 : f32 to vector<16x7xf32>
    %162 = arith.addf %161, %160 : vector<16x7xf32>
    %cst_60 = arith.constant 1.500000e+00 : f32
    %163 = arith.mulf %cst_60, %112 : f32
    %cst_61 = arith.constant 2.000000e+00 : f32
    %164 = arith.divf %163, %cst_61 : f32
    %165 = vector.broadcast %164 : f32 to vector<16x7xf32>
    %166 = arith.addf %162, %165 : vector<16x7xf32>
    %cst_62 = arith.constant -1.000000e+00 : f32
    %167 = vector.broadcast %cst_62 : f32 to vector<16x7xf32>
    %168 = arith.cmpf oge, %166, %167 : vector<16x7xf32>
    %cst_63 = arith.constant 1.600000e+01 : f32
    %169 = vector.broadcast %cst_63 : f32 to vector<16x7xf32>
    %170 = arith.cmpf ole, %166, %169 : vector<16x7xf32>
    %171 = arith.andi %168, %170 : vector<16x7xi1>
    %cst_64 = arith.constant 0.000000e+00 : f32
    %cst_65 = arith.constant 1.600000e+01 : f32
    %172 = vector.broadcast %cst_64 : f32 to vector<16x7xf32>
    %173 = arith.maximumf %172, %166 : vector<16x7xf32>
    %174 = vector.broadcast %cst_65 : f32 to vector<16x7xf32>
    %175 = arith.minimumf %174, %173 : vector<16x7xf32>
    %176 = math.floor %175 : vector<16x7xf32>
    %cst_66 = arith.constant 1.500000e+01 : f32
    %177 = vector.broadcast %cst_66 : f32 to vector<16x7xf32>
    %178 = arith.cmpf oge, %176, %177 : vector<16x7xf32>
    %cst_67 = arith.constant 1.500000e+01 : f32
    %179 = vector.broadcast %cst_67 : f32 to vector<16x7xf32>
    %180 = arith.select %178, %179, %176 : vector<16x7xi1>, vector<16x7xf32>
    %cst_68 = arith.constant 1.000000e+00 : f32
    %181 = vector.broadcast %cst_68 : f32 to vector<16x7xf32>
    %182 = arith.addf %176, %181 : vector<16x7xf32>
    %cst_69 = arith.constant 1.500000e+01 : f32
    %183 = vector.broadcast %cst_69 : f32 to vector<16x7xf32>
    %184 = arith.select %178, %183, %182 : vector<16x7xi1>, vector<16x7xf32>
    %cst_70 = arith.constant 1.500000e+01 : f32
    %185 = vector.broadcast %cst_70 : f32 to vector<16x7xf32>
    %186 = arith.select %178, %185, %175 : vector<16x7xi1>, vector<16x7xf32>
    %187 = arith.subf %186, %180 : vector<16x7xf32>
    %cst_71 = arith.constant 1.000000e+00 : f32
    %188 = vector.broadcast %cst_71 : f32 to vector<16x7xf32>
    %189 = arith.subf %188, %187 : vector<16x7xf32>
    %190 = arith.cmpf oeq, %116, %180 : vector<16x7xf32>
    %cst_72 = arith.constant 0.000000e+00 : f32
    %191 = vector.broadcast %cst_72 : f32 to vector<16x7xf32>
    %192 = arith.select %190, %189, %191 : vector<16x7xi1>, vector<16x7xf32>
    %193 = arith.cmpf oeq, %116, %184 : vector<16x7xf32>
    %cst_73 = arith.constant 0.000000e+00 : f32
    %194 = vector.broadcast %cst_73 : f32 to vector<16x7xf32>
    %195 = arith.select %193, %187, %194 : vector<16x7xi1>, vector<16x7xf32>
    %196 = arith.addf %192, %195 : vector<16x7xf32>
    %cst_74 = arith.constant 0.000000e+00 : f32
    %197 = vector.broadcast %cst_74 : f32 to vector<16x7xf32>
    %198 = arith.select %171, %196, %197 : vector<16x7xi1>, vector<16x7xf32>
    %199 = arith.addf %158, %198 : vector<16x7xf32>
    %cst_75 = arith.constant 5.000000e-01 : f32
    %200 = vector.broadcast %cst_75 : f32 to vector<16x7xf32>
    %201 = arith.mulf %199, %200 : vector<16x7xf32>
    %c3_i32_76 = arith.constant 3 : i32
    %202 = arith.muli %arg1, %c3_i32_76 : i32
    %c1_i32 = arith.constant 1 : i32
    %203 = arith.addi %202, %c1_i32 : i32
    %c1_77 = arith.constant 1 : index
    %204 = arith.index_cast %203 : i32 to index
    %205 = memref.load %arg3[%c1_77, %204] : memref<5x9xf32, #tpu.memory_space<smem>>
    %cst_78 = arith.constant 2.500000e-01 : f32
    %206 = arith.mulf %205, %cst_78 : f32
    %cst_79 = arith.constant 5.000000e-01 : f32
    %207 = arith.subf %206, %cst_79 : f32
    %c2_80 = arith.constant 2 : index
    %208 = arith.index_cast %203 : i32 to index
    %209 = memref.load %arg3[%c2_80, %208] : memref<5x9xf32, #tpu.memory_space<smem>>
    %cst_81 = arith.constant 2.500000e-01 : f32
    %210 = arith.mulf %209, %cst_81 : f32
    %cst_82 = arith.constant 5.000000e-01 : f32
    %211 = arith.subf %210, %cst_82 : f32
    %c3_83 = arith.constant 3 : index
    %212 = arith.index_cast %203 : i32 to index
    %213 = memref.load %arg3[%c3_83, %212] : memref<5x9xf32, #tpu.memory_space<smem>>
    %cst_84 = arith.constant 2.500000e-01 : f32
    %214 = arith.mulf %213, %cst_84 : f32
    %cst_85 = arith.constant 5.000000e-01 : f32
    %215 = arith.subf %214, %cst_85 : f32
    %c4_86 = arith.constant 4 : index
    %216 = arith.index_cast %203 : i32 to index
    %217 = memref.load %arg3[%c4_86, %216] : memref<5x9xf32, #tpu.memory_space<smem>>
    %cst_87 = arith.constant 2.500000e-01 : f32
    %218 = arith.mulf %217, %cst_87 : f32
    %cst_88 = arith.constant 5.000000e-01 : f32
    %219 = arith.subf %218, %cst_88 : f32
    %220 = arith.subf %215, %207 : f32
    %221 = arith.subf %219, %211 : f32
    %cst_89 = arith.constant 7.000000e+00 : f32
    %222 = arith.divf %221, %cst_89 : f32
    %223 = tpu.iota {dimensions = array<i32: 0>} : vector<7x16xi32>
    %224 = arith.sitofp %223 : vector<7x16xi32> to vector<7x16xf32>
    %225 = tpu.iota {dimensions = array<i32: 1>} : vector<7x16xi32>
    %226 = arith.sitofp %225 : vector<7x16xi32> to vector<7x16xf32>
    %cst_90 = arith.constant 0.000000e+00 : f32
    %227 = vector.broadcast %cst_90 : f32 to vector<7x16xf32>
    %228 = vector.broadcast %222 : f32 to vector<7x16xf32>
    %229 = arith.mulf %224, %228 : vector<7x16xf32>
    %230 = vector.broadcast %211 : f32 to vector<7x16xf32>
    %231 = arith.addf %230, %229 : vector<7x16xf32>
    %cst_91 = arith.constant 5.000000e-01 : f32
    %232 = arith.mulf %cst_91, %222 : f32
    %cst_92 = arith.constant 2.000000e+00 : f32
    %233 = arith.divf %232, %cst_92 : f32
    %234 = vector.broadcast %233 : f32 to vector<7x16xf32>
    %235 = arith.addf %231, %234 : vector<7x16xf32>
    %cst_93 = arith.constant -1.000000e+00 : f32
    %236 = vector.broadcast %cst_93 : f32 to vector<7x16xf32>
    %237 = arith.cmpf oge, %235, %236 : vector<7x16xf32>
    %cst_94 = arith.constant 1.600000e+01 : f32
    %238 = vector.broadcast %cst_94 : f32 to vector<7x16xf32>
    %239 = arith.cmpf ole, %235, %238 : vector<7x16xf32>
    %240 = arith.andi %237, %239 : vector<7x16xi1>
    %cst_95 = arith.constant 0.000000e+00 : f32
    %cst_96 = arith.constant 1.600000e+01 : f32
    %241 = vector.broadcast %cst_95 : f32 to vector<7x16xf32>
    %242 = arith.maximumf %241, %235 : vector<7x16xf32>
    %243 = vector.broadcast %cst_96 : f32 to vector<7x16xf32>
    %244 = arith.minimumf %243, %242 : vector<7x16xf32>
    %245 = math.floor %244 : vector<7x16xf32>
    %cst_97 = arith.constant 1.500000e+01 : f32
    %246 = vector.broadcast %cst_97 : f32 to vector<7x16xf32>
    %247 = arith.cmpf oge, %245, %246 : vector<7x16xf32>
    %cst_98 = arith.constant 1.500000e+01 : f32
    %248 = vector.broadcast %cst_98 : f32 to vector<7x16xf32>
    %249 = arith.select %247, %248, %245 : vector<7x16xi1>, vector<7x16xf32>
    %cst_99 = arith.constant 1.000000e+00 : f32
    %250 = vector.broadcast %cst_99 : f32 to vector<7x16xf32>
    %251 = arith.addf %245, %250 : vector<7x16xf32>
    %cst_100 = arith.constant 1.500000e+01 : f32
    %252 = vector.broadcast %cst_100 : f32 to vector<7x16xf32>
    %253 = arith.select %247, %252, %251 : vector<7x16xi1>, vector<7x16xf32>
    %cst_101 = arith.constant 1.500000e+01 : f32
    %254 = vector.broadcast %cst_101 : f32 to vector<7x16xf32>
    %255 = arith.select %247, %254, %244 : vector<7x16xi1>, vector<7x16xf32>
    %256 = arith.subf %255, %249 : vector<7x16xf32>
    %cst_102 = arith.constant 1.000000e+00 : f32
    %257 = vector.broadcast %cst_102 : f32 to vector<7x16xf32>
    %258 = arith.subf %257, %256 : vector<7x16xf32>
    %259 = arith.cmpf oeq, %226, %249 : vector<7x16xf32>
    %cst_103 = arith.constant 0.000000e+00 : f32
    %260 = vector.broadcast %cst_103 : f32 to vector<7x16xf32>
    %261 = arith.select %259, %258, %260 : vector<7x16xi1>, vector<7x16xf32>
    %262 = arith.cmpf oeq, %226, %253 : vector<7x16xf32>
    %cst_104 = arith.constant 0.000000e+00 : f32
    %263 = vector.broadcast %cst_104 : f32 to vector<7x16xf32>
    %264 = arith.select %262, %256, %263 : vector<7x16xi1>, vector<7x16xf32>
    %265 = arith.addf %261, %264 : vector<7x16xf32>
    %cst_105 = arith.constant 0.000000e+00 : f32
    %266 = vector.broadcast %cst_105 : f32 to vector<7x16xf32>
    %267 = arith.select %240, %265, %266 : vector<7x16xi1>, vector<7x16xf32>
    %268 = arith.addf %227, %267 : vector<7x16xf32>
    %269 = vector.broadcast %222 : f32 to vector<7x16xf32>
    %270 = arith.mulf %224, %269 : vector<7x16xf32>
    %271 = vector.broadcast %211 : f32 to vector<7x16xf32>
    %272 = arith.addf %271, %270 : vector<7x16xf32>
    %cst_106 = arith.constant 1.500000e+00 : f32
    %273 = arith.mulf %cst_106, %222 : f32
    %cst_107 = arith.constant 2.000000e+00 : f32
    %274 = arith.divf %273, %cst_107 : f32
    %275 = vector.broadcast %274 : f32 to vector<7x16xf32>
    %276 = arith.addf %272, %275 : vector<7x16xf32>
    %cst_108 = arith.constant -1.000000e+00 : f32
    %277 = vector.broadcast %cst_108 : f32 to vector<7x16xf32>
    %278 = arith.cmpf oge, %276, %277 : vector<7x16xf32>
    %cst_109 = arith.constant 1.600000e+01 : f32
    %279 = vector.broadcast %cst_109 : f32 to vector<7x16xf32>
    %280 = arith.cmpf ole, %276, %279 : vector<7x16xf32>
    %281 = arith.andi %278, %280 : vector<7x16xi1>
    %cst_110 = arith.constant 0.000000e+00 : f32
    %cst_111 = arith.constant 1.600000e+01 : f32
    %282 = vector.broadcast %cst_110 : f32 to vector<7x16xf32>
    %283 = arith.maximumf %282, %276 : vector<7x16xf32>
    %284 = vector.broadcast %cst_111 : f32 to vector<7x16xf32>
    %285 = arith.minimumf %284, %283 : vector<7x16xf32>
    %286 = math.floor %285 : vector<7x16xf32>
    %cst_112 = arith.constant 1.500000e+01 : f32
    %287 = vector.broadcast %cst_112 : f32 to vector<7x16xf32>
    %288 = arith.cmpf oge, %286, %287 : vector<7x16xf32>
    %cst_113 = arith.constant 1.500000e+01 : f32
    %289 = vector.broadcast %cst_113 : f32 to vector<7x16xf32>
    %290 = arith.select %288, %289, %286 : vector<7x16xi1>, vector<7x16xf32>
    %cst_114 = arith.constant 1.000000e+00 : f32
    %291 = vector.broadcast %cst_114 : f32 to vector<7x16xf32>
    %292 = arith.addf %286, %291 : vector<7x16xf32>
    %cst_115 = arith.constant 1.500000e+01 : f32
    %293 = vector.broadcast %cst_115 : f32 to vector<7x16xf32>
    %294 = arith.select %288, %293, %292 : vector<7x16xi1>, vector<7x16xf32>
    %cst_116 = arith.constant 1.500000e+01 : f32
    %295 = vector.broadcast %cst_116 : f32 to vector<7x16xf32>
    %296 = arith.select %288, %295, %285 : vector<7x16xi1>, vector<7x16xf32>
    %297 = arith.subf %296, %290 : vector<7x16xf32>
    %cst_117 = arith.constant 1.000000e+00 : f32
    %298 = vector.broadcast %cst_117 : f32 to vector<7x16xf32>
    %299 = arith.subf %298, %297 : vector<7x16xf32>
    %300 = arith.cmpf oeq, %226, %290 : vector<7x16xf32>
    %cst_118 = arith.constant 0.000000e+00 : f32
    %301 = vector.broadcast %cst_118 : f32 to vector<7x16xf32>
    %302 = arith.select %300, %299, %301 : vector<7x16xi1>, vector<7x16xf32>
    %303 = arith.cmpf oeq, %226, %294 : vector<7x16xf32>
    %cst_119 = arith.constant 0.000000e+00 : f32
    %304 = vector.broadcast %cst_119 : f32 to vector<7x16xf32>
    %305 = arith.select %303, %297, %304 : vector<7x16xi1>, vector<7x16xf32>
    %306 = arith.addf %302, %305 : vector<7x16xf32>
    %cst_120 = arith.constant 0.000000e+00 : f32
    %307 = vector.broadcast %cst_120 : f32 to vector<7x16xf32>
    %308 = arith.select %281, %306, %307 : vector<7x16xi1>, vector<7x16xf32>
    %309 = arith.addf %268, %308 : vector<7x16xf32>
    %cst_121 = arith.constant 5.000000e-01 : f32
    %310 = vector.broadcast %cst_121 : f32 to vector<7x16xf32>
    %311 = arith.mulf %309, %310 : vector<7x16xf32>
    %cst_122 = arith.constant 7.000000e+00 : f32
    %312 = arith.divf %220, %cst_122 : f32
    %313 = tpu.iota {dimensions = array<i32: 1>} : vector<16x7xi32>
    %314 = arith.sitofp %313 : vector<16x7xi32> to vector<16x7xf32>
    %315 = tpu.iota {dimensions = array<i32: 0>} : vector<16x7xi32>
    %316 = arith.sitofp %315 : vector<16x7xi32> to vector<16x7xf32>
    %cst_123 = arith.constant 0.000000e+00 : f32
    %317 = vector.broadcast %cst_123 : f32 to vector<16x7xf32>
    %318 = vector.broadcast %312 : f32 to vector<16x7xf32>
    %319 = arith.mulf %314, %318 : vector<16x7xf32>
    %320 = vector.broadcast %207 : f32 to vector<16x7xf32>
    %321 = arith.addf %320, %319 : vector<16x7xf32>
    %cst_124 = arith.constant 5.000000e-01 : f32
    %322 = arith.mulf %cst_124, %312 : f32
    %cst_125 = arith.constant 2.000000e+00 : f32
    %323 = arith.divf %322, %cst_125 : f32
    %324 = vector.broadcast %323 : f32 to vector<16x7xf32>
    %325 = arith.addf %321, %324 : vector<16x7xf32>
    %cst_126 = arith.constant -1.000000e+00 : f32
    %326 = vector.broadcast %cst_126 : f32 to vector<16x7xf32>
    %327 = arith.cmpf oge, %325, %326 : vector<16x7xf32>
    %cst_127 = arith.constant 1.600000e+01 : f32
    %328 = vector.broadcast %cst_127 : f32 to vector<16x7xf32>
    %329 = arith.cmpf ole, %325, %328 : vector<16x7xf32>
    %330 = arith.andi %327, %329 : vector<16x7xi1>
    %cst_128 = arith.constant 0.000000e+00 : f32
    %cst_129 = arith.constant 1.600000e+01 : f32
    %331 = vector.broadcast %cst_128 : f32 to vector<16x7xf32>
    %332 = arith.maximumf %331, %325 : vector<16x7xf32>
    %333 = vector.broadcast %cst_129 : f32 to vector<16x7xf32>
    %334 = arith.minimumf %333, %332 : vector<16x7xf32>
    %335 = math.floor %334 : vector<16x7xf32>
    %cst_130 = arith.constant 1.500000e+01 : f32
    %336 = vector.broadcast %cst_130 : f32 to vector<16x7xf32>
    %337 = arith.cmpf oge, %335, %336 : vector<16x7xf32>
    %cst_131 = arith.constant 1.500000e+01 : f32
    %338 = vector.broadcast %cst_131 : f32 to vector<16x7xf32>
    %339 = arith.select %337, %338, %335 : vector<16x7xi1>, vector<16x7xf32>
    %cst_132 = arith.constant 1.000000e+00 : f32
    %340 = vector.broadcast %cst_132 : f32 to vector<16x7xf32>
    %341 = arith.addf %335, %340 : vector<16x7xf32>
    %cst_133 = arith.constant 1.500000e+01 : f32
    %342 = vector.broadcast %cst_133 : f32 to vector<16x7xf32>
    %343 = arith.select %337, %342, %341 : vector<16x7xi1>, vector<16x7xf32>
    %cst_134 = arith.constant 1.500000e+01 : f32
    %344 = vector.broadcast %cst_134 : f32 to vector<16x7xf32>
    %345 = arith.select %337, %344, %334 : vector<16x7xi1>, vector<16x7xf32>
    %346 = arith.subf %345, %339 : vector<16x7xf32>
    %cst_135 = arith.constant 1.000000e+00 : f32
    %347 = vector.broadcast %cst_135 : f32 to vector<16x7xf32>
    %348 = arith.subf %347, %346 : vector<16x7xf32>
    %349 = arith.cmpf oeq, %316, %339 : vector<16x7xf32>
    %cst_136 = arith.constant 0.000000e+00 : f32
    %350 = vector.broadcast %cst_136 : f32 to vector<16x7xf32>
    %351 = arith.select %349, %348, %350 : vector<16x7xi1>, vector<16x7xf32>
    %352 = arith.cmpf oeq, %316, %343 : vector<16x7xf32>
    %cst_137 = arith.constant 0.000000e+00 : f32
    %353 = vector.broadcast %cst_137 : f32 to vector<16x7xf32>
    %354 = arith.select %352, %346, %353 : vector<16x7xi1>, vector<16x7xf32>
    %355 = arith.addf %351, %354 : vector<16x7xf32>
    %cst_138 = arith.constant 0.000000e+00 : f32
    %356 = vector.broadcast %cst_138 : f32 to vector<16x7xf32>
    %357 = arith.select %330, %355, %356 : vector<16x7xi1>, vector<16x7xf32>
    %358 = arith.addf %317, %357 : vector<16x7xf32>
    %359 = vector.broadcast %312 : f32 to vector<16x7xf32>
    %360 = arith.mulf %314, %359 : vector<16x7xf32>
    %361 = vector.broadcast %207 : f32 to vector<16x7xf32>
    %362 = arith.addf %361, %360 : vector<16x7xf32>
    %cst_139 = arith.constant 1.500000e+00 : f32
    %363 = arith.mulf %cst_139, %312 : f32
    %cst_140 = arith.constant 2.000000e+00 : f32
    %364 = arith.divf %363, %cst_140 : f32
    %365 = vector.broadcast %364 : f32 to vector<16x7xf32>
    %366 = arith.addf %362, %365 : vector<16x7xf32>
    %cst_141 = arith.constant -1.000000e+00 : f32
    %367 = vector.broadcast %cst_141 : f32 to vector<16x7xf32>
    %368 = arith.cmpf oge, %366, %367 : vector<16x7xf32>
    %cst_142 = arith.constant 1.600000e+01 : f32
    %369 = vector.broadcast %cst_142 : f32 to vector<16x7xf32>
    %370 = arith.cmpf ole, %366, %369 : vector<16x7xf32>
    %371 = arith.andi %368, %370 : vector<16x7xi1>
    %cst_143 = arith.constant 0.000000e+00 : f32
    %cst_144 = arith.constant 1.600000e+01 : f32
    %372 = vector.broadcast %cst_143 : f32 to vector<16x7xf32>
    %373 = arith.maximumf %372, %366 : vector<16x7xf32>
    %374 = vector.broadcast %cst_144 : f32 to vector<16x7xf32>
    %375 = arith.minimumf %374, %373 : vector<16x7xf32>
    %376 = math.floor %375 : vector<16x7xf32>
    %cst_145 = arith.constant 1.500000e+01 : f32
    %377 = vector.broadcast %cst_145 : f32 to vector<16x7xf32>
    %378 = arith.cmpf oge, %376, %377 : vector<16x7xf32>
    %cst_146 = arith.constant 1.500000e+01 : f32
    %379 = vector.broadcast %cst_146 : f32 to vector<16x7xf32>
    %380 = arith.select %378, %379, %376 : vector<16x7xi1>, vector<16x7xf32>
    %cst_147 = arith.constant 1.000000e+00 : f32
    %381 = vector.broadcast %cst_147 : f32 to vector<16x7xf32>
    %382 = arith.addf %376, %381 : vector<16x7xf32>
    %cst_148 = arith.constant 1.500000e+01 : f32
    %383 = vector.broadcast %cst_148 : f32 to vector<16x7xf32>
    %384 = arith.select %378, %383, %382 : vector<16x7xi1>, vector<16x7xf32>
    %cst_149 = arith.constant 1.500000e+01 : f32
    %385 = vector.broadcast %cst_149 : f32 to vector<16x7xf32>
    %386 = arith.select %378, %385, %375 : vector<16x7xi1>, vector<16x7xf32>
    %387 = arith.subf %386, %380 : vector<16x7xf32>
    %cst_150 = arith.constant 1.000000e+00 : f32
    %388 = vector.broadcast %cst_150 : f32 to vector<16x7xf32>
    %389 = arith.subf %388, %387 : vector<16x7xf32>
    %390 = arith.cmpf oeq, %316, %380 : vector<16x7xf32>
    %cst_151 = arith.constant 0.000000e+00 : f32
    %391 = vector.broadcast %cst_151 : f32 to vector<16x7xf32>
    %392 = arith.select %390, %389, %391 : vector<16x7xi1>, vector<16x7xf32>
    %393 = arith.cmpf oeq, %316, %384 : vector<16x7xf32>
    %cst_152 = arith.constant 0.000000e+00 : f32
    %394 = vector.broadcast %cst_152 : f32 to vector<16x7xf32>
    %395 = arith.select %393, %387, %394 : vector<16x7xi1>, vector<16x7xf32>
    %396 = arith.addf %392, %395 : vector<16x7xf32>
    %cst_153 = arith.constant 0.000000e+00 : f32
    %397 = vector.broadcast %cst_153 : f32 to vector<16x7xf32>
    %398 = arith.select %371, %396, %397 : vector<16x7xi1>, vector<16x7xf32>
    %399 = arith.addf %358, %398 : vector<16x7xf32>
    %cst_154 = arith.constant 5.000000e-01 : f32
    %400 = vector.broadcast %cst_154 : f32 to vector<16x7xf32>
    %401 = arith.mulf %399, %400 : vector<16x7xf32>
    %c3_i32_155 = arith.constant 3 : i32
    %402 = arith.muli %arg1, %c3_i32_155 : i32
    %c2_i32 = arith.constant 2 : i32
    %403 = arith.addi %402, %c2_i32 : i32
    %c1_156 = arith.constant 1 : index
    %404 = arith.index_cast %403 : i32 to index
    %405 = memref.load %arg3[%c1_156, %404] : memref<5x9xf32, #tpu.memory_space<smem>>
    %cst_157 = arith.constant 2.500000e-01 : f32
    %406 = arith.mulf %405, %cst_157 : f32
    %cst_158 = arith.constant 5.000000e-01 : f32
    %407 = arith.subf %406, %cst_158 : f32
    %c2_159 = arith.constant 2 : index
    %408 = arith.index_cast %403 : i32 to index
    %409 = memref.load %arg3[%c2_159, %408] : memref<5x9xf32, #tpu.memory_space<smem>>
    %cst_160 = arith.constant 2.500000e-01 : f32
    %410 = arith.mulf %409, %cst_160 : f32
    %cst_161 = arith.constant 5.000000e-01 : f32
    %411 = arith.subf %410, %cst_161 : f32
    %c3_162 = arith.constant 3 : index
    %412 = arith.index_cast %403 : i32 to index
    %413 = memref.load %arg3[%c3_162, %412] : memref<5x9xf32, #tpu.memory_space<smem>>
    %cst_163 = arith.constant 2.500000e-01 : f32
    %414 = arith.mulf %413, %cst_163 : f32
    %cst_164 = arith.constant 5.000000e-01 : f32
    %415 = arith.subf %414, %cst_164 : f32
    %c4_165 = arith.constant 4 : index
    %416 = arith.index_cast %403 : i32 to index
    %417 = memref.load %arg3[%c4_165, %416] : memref<5x9xf32, #tpu.memory_space<smem>>
    %cst_166 = arith.constant 2.500000e-01 : f32
    %418 = arith.mulf %417, %cst_166 : f32
    %cst_167 = arith.constant 5.000000e-01 : f32
    %419 = arith.subf %418, %cst_167 : f32
    %420 = arith.subf %415, %407 : f32
    %421 = arith.subf %419, %411 : f32
    %cst_168 = arith.constant 7.000000e+00 : f32
    %422 = arith.divf %421, %cst_168 : f32
    %423 = tpu.iota {dimensions = array<i32: 0>} : vector<7x16xi32>
    %424 = arith.sitofp %423 : vector<7x16xi32> to vector<7x16xf32>
    %425 = tpu.iota {dimensions = array<i32: 1>} : vector<7x16xi32>
    %426 = arith.sitofp %425 : vector<7x16xi32> to vector<7x16xf32>
    %cst_169 = arith.constant 0.000000e+00 : f32
    %427 = vector.broadcast %cst_169 : f32 to vector<7x16xf32>
    %428 = vector.broadcast %422 : f32 to vector<7x16xf32>
    %429 = arith.mulf %424, %428 : vector<7x16xf32>
    %430 = vector.broadcast %411 : f32 to vector<7x16xf32>
    %431 = arith.addf %430, %429 : vector<7x16xf32>
    %cst_170 = arith.constant 5.000000e-01 : f32
    %432 = arith.mulf %cst_170, %422 : f32
    %cst_171 = arith.constant 2.000000e+00 : f32
    %433 = arith.divf %432, %cst_171 : f32
    %434 = vector.broadcast %433 : f32 to vector<7x16xf32>
    %435 = arith.addf %431, %434 : vector<7x16xf32>
    %cst_172 = arith.constant -1.000000e+00 : f32
    %436 = vector.broadcast %cst_172 : f32 to vector<7x16xf32>
    %437 = arith.cmpf oge, %435, %436 : vector<7x16xf32>
    %cst_173 = arith.constant 1.600000e+01 : f32
    %438 = vector.broadcast %cst_173 : f32 to vector<7x16xf32>
    %439 = arith.cmpf ole, %435, %438 : vector<7x16xf32>
    %440 = arith.andi %437, %439 : vector<7x16xi1>
    %cst_174 = arith.constant 0.000000e+00 : f32
    %cst_175 = arith.constant 1.600000e+01 : f32
    %441 = vector.broadcast %cst_174 : f32 to vector<7x16xf32>
    %442 = arith.maximumf %441, %435 : vector<7x16xf32>
    %443 = vector.broadcast %cst_175 : f32 to vector<7x16xf32>
    %444 = arith.minimumf %443, %442 : vector<7x16xf32>
    %445 = math.floor %444 : vector<7x16xf32>
    %cst_176 = arith.constant 1.500000e+01 : f32
    %446 = vector.broadcast %cst_176 : f32 to vector<7x16xf32>
    %447 = arith.cmpf oge, %445, %446 : vector<7x16xf32>
    %cst_177 = arith.constant 1.500000e+01 : f32
    %448 = vector.broadcast %cst_177 : f32 to vector<7x16xf32>
    %449 = arith.select %447, %448, %445 : vector<7x16xi1>, vector<7x16xf32>
    %cst_178 = arith.constant 1.000000e+00 : f32
    %450 = vector.broadcast %cst_178 : f32 to vector<7x16xf32>
    %451 = arith.addf %445, %450 : vector<7x16xf32>
    %cst_179 = arith.constant 1.500000e+01 : f32
    %452 = vector.broadcast %cst_179 : f32 to vector<7x16xf32>
    %453 = arith.select %447, %452, %451 : vector<7x16xi1>, vector<7x16xf32>
    %cst_180 = arith.constant 1.500000e+01 : f32
    %454 = vector.broadcast %cst_180 : f32 to vector<7x16xf32>
    %455 = arith.select %447, %454, %444 : vector<7x16xi1>, vector<7x16xf32>
    %456 = arith.subf %455, %449 : vector<7x16xf32>
    %cst_181 = arith.constant 1.000000e+00 : f32
    %457 = vector.broadcast %cst_181 : f32 to vector<7x16xf32>
    %458 = arith.subf %457, %456 : vector<7x16xf32>
    %459 = arith.cmpf oeq, %426, %449 : vector<7x16xf32>
    %cst_182 = arith.constant 0.000000e+00 : f32
    %460 = vector.broadcast %cst_182 : f32 to vector<7x16xf32>
    %461 = arith.select %459, %458, %460 : vector<7x16xi1>, vector<7x16xf32>
    %462 = arith.cmpf oeq, %426, %453 : vector<7x16xf32>
    %cst_183 = arith.constant 0.000000e+00 : f32
    %463 = vector.broadcast %cst_183 : f32 to vector<7x16xf32>
    %464 = arith.select %462, %456, %463 : vector<7x16xi1>, vector<7x16xf32>
    %465 = arith.addf %461, %464 : vector<7x16xf32>
    %cst_184 = arith.constant 0.000000e+00 : f32
    %466 = vector.broadcast %cst_184 : f32 to vector<7x16xf32>
    %467 = arith.select %440, %465, %466 : vector<7x16xi1>, vector<7x16xf32>
    %468 = arith.addf %427, %467 : vector<7x16xf32>
    %469 = vector.broadcast %422 : f32 to vector<7x16xf32>
    %470 = arith.mulf %424, %469 : vector<7x16xf32>
    %471 = vector.broadcast %411 : f32 to vector<7x16xf32>
    %472 = arith.addf %471, %470 : vector<7x16xf32>
    %cst_185 = arith.constant 1.500000e+00 : f32
    %473 = arith.mulf %cst_185, %422 : f32
    %cst_186 = arith.constant 2.000000e+00 : f32
    %474 = arith.divf %473, %cst_186 : f32
    %475 = vector.broadcast %474 : f32 to vector<7x16xf32>
    %476 = arith.addf %472, %475 : vector<7x16xf32>
    %cst_187 = arith.constant -1.000000e+00 : f32
    %477 = vector.broadcast %cst_187 : f32 to vector<7x16xf32>
    %478 = arith.cmpf oge, %476, %477 : vector<7x16xf32>
    %cst_188 = arith.constant 1.600000e+01 : f32
    %479 = vector.broadcast %cst_188 : f32 to vector<7x16xf32>
    %480 = arith.cmpf ole, %476, %479 : vector<7x16xf32>
    %481 = arith.andi %478, %480 : vector<7x16xi1>
    %cst_189 = arith.constant 0.000000e+00 : f32
    %cst_190 = arith.constant 1.600000e+01 : f32
    %482 = vector.broadcast %cst_189 : f32 to vector<7x16xf32>
    %483 = arith.maximumf %482, %476 : vector<7x16xf32>
    %484 = vector.broadcast %cst_190 : f32 to vector<7x16xf32>
    %485 = arith.minimumf %484, %483 : vector<7x16xf32>
    %486 = math.floor %485 : vector<7x16xf32>
    %cst_191 = arith.constant 1.500000e+01 : f32
    %487 = vector.broadcast %cst_191 : f32 to vector<7x16xf32>
    %488 = arith.cmpf oge, %486, %487 : vector<7x16xf32>
    %cst_192 = arith.constant 1.500000e+01 : f32
    %489 = vector.broadcast %cst_192 : f32 to vector<7x16xf32>
    %490 = arith.select %488, %489, %486 : vector<7x16xi1>, vector<7x16xf32>
    %cst_193 = arith.constant 1.000000e+00 : f32
    %491 = vector.broadcast %cst_193 : f32 to vector<7x16xf32>
    %492 = arith.addf %486, %491 : vector<7x16xf32>
    %cst_194 = arith.constant 1.500000e+01 : f32
    %493 = vector.broadcast %cst_194 : f32 to vector<7x16xf32>
    %494 = arith.select %488, %493, %492 : vector<7x16xi1>, vector<7x16xf32>
    %cst_195 = arith.constant 1.500000e+01 : f32
    %495 = vector.broadcast %cst_195 : f32 to vector<7x16xf32>
    %496 = arith.select %488, %495, %485 : vector<7x16xi1>, vector<7x16xf32>
    %497 = arith.subf %496, %490 : vector<7x16xf32>
    %cst_196 = arith.constant 1.000000e+00 : f32
    %498 = vector.broadcast %cst_196 : f32 to vector<7x16xf32>
    %499 = arith.subf %498, %497 : vector<7x16xf32>
    %500 = arith.cmpf oeq, %426, %490 : vector<7x16xf32>
    %cst_197 = arith.constant 0.000000e+00 : f32
    %501 = vector.broadcast %cst_197 : f32 to vector<7x16xf32>
    %502 = arith.select %500, %499, %501 : vector<7x16xi1>, vector<7x16xf32>
    %503 = arith.cmpf oeq, %426, %494 : vector<7x16xf32>
    %cst_198 = arith.constant 0.000000e+00 : f32
    %504 = vector.broadcast %cst_198 : f32 to vector<7x16xf32>
    %505 = arith.select %503, %497, %504 : vector<7x16xi1>, vector<7x16xf32>
    %506 = arith.addf %502, %505 : vector<7x16xf32>
    %cst_199 = arith.constant 0.000000e+00 : f32
    %507 = vector.broadcast %cst_199 : f32 to vector<7x16xf32>
    %508 = arith.select %481, %506, %507 : vector<7x16xi1>, vector<7x16xf32>
    %509 = arith.addf %468, %508 : vector<7x16xf32>
    %cst_200 = arith.constant 5.000000e-01 : f32
    %510 = vector.broadcast %cst_200 : f32 to vector<7x16xf32>
    %511 = arith.mulf %509, %510 : vector<7x16xf32>
    %cst_201 = arith.constant 7.000000e+00 : f32
    %512 = arith.divf %420, %cst_201 : f32
    %513 = tpu.iota {dimensions = array<i32: 1>} : vector<16x7xi32>
    %514 = arith.sitofp %513 : vector<16x7xi32> to vector<16x7xf32>
    %515 = tpu.iota {dimensions = array<i32: 0>} : vector<16x7xi32>
    %516 = arith.sitofp %515 : vector<16x7xi32> to vector<16x7xf32>
    %cst_202 = arith.constant 0.000000e+00 : f32
    %517 = vector.broadcast %cst_202 : f32 to vector<16x7xf32>
    %518 = vector.broadcast %512 : f32 to vector<16x7xf32>
    %519 = arith.mulf %514, %518 : vector<16x7xf32>
    %520 = vector.broadcast %407 : f32 to vector<16x7xf32>
    %521 = arith.addf %520, %519 : vector<16x7xf32>
    %cst_203 = arith.constant 5.000000e-01 : f32
    %522 = arith.mulf %cst_203, %512 : f32
    %cst_204 = arith.constant 2.000000e+00 : f32
    %523 = arith.divf %522, %cst_204 : f32
    %524 = vector.broadcast %523 : f32 to vector<16x7xf32>
    %525 = arith.addf %521, %524 : vector<16x7xf32>
    %cst_205 = arith.constant -1.000000e+00 : f32
    %526 = vector.broadcast %cst_205 : f32 to vector<16x7xf32>
    %527 = arith.cmpf oge, %525, %526 : vector<16x7xf32>
    %cst_206 = arith.constant 1.600000e+01 : f32
    %528 = vector.broadcast %cst_206 : f32 to vector<16x7xf32>
    %529 = arith.cmpf ole, %525, %528 : vector<16x7xf32>
    %530 = arith.andi %527, %529 : vector<16x7xi1>
    %cst_207 = arith.constant 0.000000e+00 : f32
    %cst_208 = arith.constant 1.600000e+01 : f32
    %531 = vector.broadcast %cst_207 : f32 to vector<16x7xf32>
    %532 = arith.maximumf %531, %525 : vector<16x7xf32>
    %533 = vector.broadcast %cst_208 : f32 to vector<16x7xf32>
    %534 = arith.minimumf %533, %532 : vector<16x7xf32>
    %535 = math.floor %534 : vector<16x7xf32>
    %cst_209 = arith.constant 1.500000e+01 : f32
    %536 = vector.broadcast %cst_209 : f32 to vector<16x7xf32>
    %537 = arith.cmpf oge, %535, %536 : vector<16x7xf32>
    %cst_210 = arith.constant 1.500000e+01 : f32
    %538 = vector.broadcast %cst_210 : f32 to vector<16x7xf32>
    %539 = arith.select %537, %538, %535 : vector<16x7xi1>, vector<16x7xf32>
    %cst_211 = arith.constant 1.000000e+00 : f32
    %540 = vector.broadcast %cst_211 : f32 to vector<16x7xf32>
    %541 = arith.addf %535, %540 : vector<16x7xf32>
    %cst_212 = arith.constant 1.500000e+01 : f32
    %542 = vector.broadcast %cst_212 : f32 to vector<16x7xf32>
    %543 = arith.select %537, %542, %541 : vector<16x7xi1>, vector<16x7xf32>
    %cst_213 = arith.constant 1.500000e+01 : f32
    %544 = vector.broadcast %cst_213 : f32 to vector<16x7xf32>
    %545 = arith.select %537, %544, %534 : vector<16x7xi1>, vector<16x7xf32>
    %546 = arith.subf %545, %539 : vector<16x7xf32>
    %cst_214 = arith.constant 1.000000e+00 : f32
    %547 = vector.broadcast %cst_214 : f32 to vector<16x7xf32>
    %548 = arith.subf %547, %546 : vector<16x7xf32>
    %549 = arith.cmpf oeq, %516, %539 : vector<16x7xf32>
    %cst_215 = arith.constant 0.000000e+00 : f32
    %550 = vector.broadcast %cst_215 : f32 to vector<16x7xf32>
    %551 = arith.select %549, %548, %550 : vector<16x7xi1>, vector<16x7xf32>
    %552 = arith.cmpf oeq, %516, %543 : vector<16x7xf32>
    %cst_216 = arith.constant 0.000000e+00 : f32
    %553 = vector.broadcast %cst_216 : f32 to vector<16x7xf32>
    %554 = arith.select %552, %546, %553 : vector<16x7xi1>, vector<16x7xf32>
    %555 = arith.addf %551, %554 : vector<16x7xf32>
    %cst_217 = arith.constant 0.000000e+00 : f32
    %556 = vector.broadcast %cst_217 : f32 to vector<16x7xf32>
    %557 = arith.select %530, %555, %556 : vector<16x7xi1>, vector<16x7xf32>
    %558 = arith.addf %517, %557 : vector<16x7xf32>
    %559 = vector.broadcast %512 : f32 to vector<16x7xf32>
    %560 = arith.mulf %514, %559 : vector<16x7xf32>
    %561 = vector.broadcast %407 : f32 to vector<16x7xf32>
    %562 = arith.addf %561, %560 : vector<16x7xf32>
    %cst_218 = arith.constant 1.500000e+00 : f32
    %563 = arith.mulf %cst_218, %512 : f32
    %cst_219 = arith.constant 2.000000e+00 : f32
    %564 = arith.divf %563, %cst_219 : f32
    %565 = vector.broadcast %564 : f32 to vector<16x7xf32>
    %566 = arith.addf %562, %565 : vector<16x7xf32>
    %cst_220 = arith.constant -1.000000e+00 : f32
    %567 = vector.broadcast %cst_220 : f32 to vector<16x7xf32>
    %568 = arith.cmpf oge, %566, %567 : vector<16x7xf32>
    %cst_221 = arith.constant 1.600000e+01 : f32
    %569 = vector.broadcast %cst_221 : f32 to vector<16x7xf32>
    %570 = arith.cmpf ole, %566, %569 : vector<16x7xf32>
    %571 = arith.andi %568, %570 : vector<16x7xi1>
    %cst_222 = arith.constant 0.000000e+00 : f32
    %cst_223 = arith.constant 1.600000e+01 : f32
    %572 = vector.broadcast %cst_222 : f32 to vector<16x7xf32>
    %573 = arith.maximumf %572, %566 : vector<16x7xf32>
    %574 = vector.broadcast %cst_223 : f32 to vector<16x7xf32>
    %575 = arith.minimumf %574, %573 : vector<16x7xf32>
    %576 = math.floor %575 : vector<16x7xf32>
    %cst_224 = arith.constant 1.500000e+01 : f32
    %577 = vector.broadcast %cst_224 : f32 to vector<16x7xf32>
    %578 = arith.cmpf oge, %576, %577 : vector<16x7xf32>
    %cst_225 = arith.constant 1.500000e+01 : f32
    %579 = vector.broadcast %cst_225 : f32 to vector<16x7xf32>
    %580 = arith.select %578, %579, %576 : vector<16x7xi1>, vector<16x7xf32>
    %cst_226 = arith.constant 1.000000e+00 : f32
    %581 = vector.broadcast %cst_226 : f32 to vector<16x7xf32>
    %582 = arith.addf %576, %581 : vector<16x7xf32>
    %cst_227 = arith.constant 1.500000e+01 : f32
    %583 = vector.broadcast %cst_227 : f32 to vector<16x7xf32>
    %584 = arith.select %578, %583, %582 : vector<16x7xi1>, vector<16x7xf32>
    %cst_228 = arith.constant 1.500000e+01 : f32
    %585 = vector.broadcast %cst_228 : f32 to vector<16x7xf32>
    %586 = arith.select %578, %585, %575 : vector<16x7xi1>, vector<16x7xf32>
    %587 = arith.subf %586, %580 : vector<16x7xf32>
    %cst_229 = arith.constant 1.000000e+00 : f32
    %588 = vector.broadcast %cst_229 : f32 to vector<16x7xf32>
    %589 = arith.subf %588, %587 : vector<16x7xf32>
    %590 = arith.cmpf oeq, %516, %580 : vector<16x7xf32>
    %cst_230 = arith.constant 0.000000e+00 : f32
    %591 = vector.broadcast %cst_230 : f32 to vector<16x7xf32>
    %592 = arith.select %590, %589, %591 : vector<16x7xi1>, vector<16x7xf32>
    %593 = arith.cmpf oeq, %516, %584 : vector<16x7xf32>
    %cst_231 = arith.constant 0.000000e+00 : f32
    %594 = vector.broadcast %cst_231 : f32 to vector<16x7xf32>
    %595 = arith.select %593, %587, %594 : vector<16x7xi1>, vector<16x7xf32>
    %596 = arith.addf %592, %595 : vector<16x7xf32>
    %cst_232 = arith.constant 0.000000e+00 : f32
    %597 = vector.broadcast %cst_232 : f32 to vector<16x7xf32>
    %598 = arith.select %571, %596, %597 : vector<16x7xi1>, vector<16x7xf32>
    %599 = arith.addf %558, %598 : vector<16x7xf32>
    %cst_233 = arith.constant 5.000000e-01 : f32
    %600 = vector.broadcast %cst_233 : f32 to vector<16x7xf32>
    %601 = arith.mulf %599, %600 : vector<16x7xf32>
    %602 = tpu.concatenate %111, %311, %511 in 0 : vector<7x16xf32>, vector<7x16xf32>, vector<7x16xf32> -> vector<21x16xf32>
    %603 = vector.shape_cast %602 : vector<21x16xf32> to vector<1x21x16xf32>
    %604 = vector.shape_cast %603 : vector<1x21x16xf32> to vector<1x21x16xf32>
    %605 = vector.broadcast %604 : vector<1x21x16xf32> to vector<4x21x16xf32>
    "tpu.trace_start"() <{level = 10 : i32, message = "cqh,chw->cqw"}> : () -> ()
    %cst_234 = arith.constant dense<0.000000e+00> : vector<4x21x16xf32>
    %606 = tpu.matmul %605, %1, %cst_234 {dimension_numbers = #tpu.dot_dimension_numbers<[2], [1], [1], [2], [0, 0, 0, 1, 1, 2], [0], [0]>} : vector<4x21x16xf32>, vector<4x16x16xf32>, vector<4x21x16xf32> -> vector<4x21x16xf32>
    "tpu.trace_stop"() : () -> ()
    %607 = vector.extract_strided_slice %606 {offsets = [0, 0, 0], sizes = [4, 7, 16], strides = [1, 1, 1]} : vector<4x21x16xf32> to vector<4x7x16xf32>
    %608 = vector.shape_cast %201 : vector<16x7xf32> to vector<1x16x7xf32>
    %609 = vector.shape_cast %608 : vector<1x16x7xf32> to vector<1x16x7xf32>
    %610 = vector.broadcast %609 : vector<1x16x7xf32> to vector<4x16x7xf32>
    "tpu.trace_start"() <{level = 10 : i32, message = "cyw,cwx->cyx"}> : () -> ()
    %cst_235 = arith.constant dense<0.000000e+00> : vector<4x7x7xf32>
    %611 = tpu.matmul %607, %610, %cst_235 {dimension_numbers = #tpu.dot_dimension_numbers<[2], [1], [1], [2], [0, 0, 0, 1, 1, 2], [0], [0]>} : vector<4x7x16xf32>, vector<4x16x7xf32>, vector<4x7x7xf32> -> vector<4x7x7xf32>
    "tpu.trace_stop"() : () -> ()
    %c0_236 = arith.constant 0 : index
    %c0_237 = arith.constant 0 : index
    %c0_238 = arith.constant 0 : index
    %c0_239 = arith.constant 0 : index
    %612 = vector.load %arg5[%c0_236, %c0_237, %c0_238, %c0_239] : memref<3x4x7x7xf32, #tpu.memory_space<vmem>>, vector<1x4x7x7xf32>
    %613 = vector.shape_cast %612 : vector<1x4x7x7xf32> to vector<4x7x7xf32>
    %614 = vector.shape_cast %611 : vector<4x7x7xf32> to vector<1x4x7x7xf32>
    tpu.vector_store %arg5[%c0_236, %c0_237, %c0_238, %c0_239], %614 {strides = array<i32>} : memref<3x4x7x7xf32, #tpu.memory_space<vmem>>, vector<1x4x7x7xf32>,
    %615 = vector.extract_strided_slice %606 {offsets = [0, 7, 0], sizes = [4, 7, 16], strides = [1, 1, 1]} : vector<4x21x16xf32> to vector<4x7x16xf32>
    %616 = vector.shape_cast %401 : vector<16x7xf32> to vector<1x16x7xf32>
    %617 = vector.shape_cast %616 : vector<1x16x7xf32> to vector<1x16x7xf32>
    %618 = vector.broadcast %617 : vector<1x16x7xf32> to vector<4x16x7xf32>
    "tpu.trace_start"() <{level = 10 : i32, message = "cyw,cwx->cyx"}> : () -> ()
    %cst_240 = arith.constant dense<0.000000e+00> : vector<4x7x7xf32>
    %619 = tpu.matmul %615, %618, %cst_240 {dimension_numbers = #tpu.dot_dimension_numbers<[2], [1], [1], [2], [0, 0, 0, 1, 1, 2], [0], [0]>} : vector<4x7x16xf32>, vector<4x16x7xf32>, vector<4x7x7xf32> -> vector<4x7x7xf32>
    "tpu.trace_stop"() : () -> ()
    %c1_241 = arith.constant 1 : index
    %c0_242 = arith.constant 0 : index
    %c0_243 = arith.constant 0 : index
    %c0_244 = arith.constant 0 : index
    %620 = vector.load %arg5[%c1_241, %c0_242, %c0_243, %c0_244] : memref<3x4x7x7xf32, #tpu.memory_space<vmem>>, vector<1x4x7x7xf32>
    %621 = vector.shape_cast %620 : vector<1x4x7x7xf32> to vector<4x7x7xf32>
    %622 = vector.shape_cast %619 : vector<4x7x7xf32> to vector<1x4x7x7xf32>
    tpu.vector_store %arg5[%c1_241, %c0_242, %c0_243, %c0_244], %622 {strides = array<i32>} : memref<3x4x7x7xf32, #tpu.memory_space<vmem>>, vector<1x4x7x7xf32>,
    %623 = vector.extract_strided_slice %606 {offsets = [0, 14, 0], sizes = [4, 7, 16], strides = [1, 1, 1]} : vector<4x21x16xf32> to vector<4x7x16xf32>
    %624 = vector.shape_cast %601 : vector<16x7xf32> to vector<1x16x7xf32>
    %625 = vector.shape_cast %624 : vector<1x16x7xf32> to vector<1x16x7xf32>
    %626 = vector.broadcast %625 : vector<1x16x7xf32> to vector<4x16x7xf32>
    "tpu.trace_start"() <{level = 10 : i32, message = "cyw,cwx->cyx"}> : () -> ()
    %cst_245 = arith.constant dense<0.000000e+00> : vector<4x7x7xf32>
    %627 = tpu.matmul %623, %626, %cst_245 {dimension_numbers = #tpu.dot_dimension_numbers<[2], [1], [1], [2], [0, 0, 0, 1, 1, 2], [0], [0]>} : vector<4x7x16xf32>, vector<4x16x7xf32>, vector<4x7x7xf32> -> vector<4x7x7xf32>
    "tpu.trace_stop"() : () -> ()
    %c2_246 = arith.constant 2 : index
    %c0_247 = arith.constant 0 : index
    %c0_248 = arith.constant 0 : index
    %c0_249 = arith.constant 0 : index
    %628 = vector.load %arg5[%c2_246, %c0_247, %c0_248, %c0_249] : memref<3x4x7x7xf32, #tpu.memory_space<vmem>>, vector<1x4x7x7xf32>
    %629 = vector.shape_cast %628 : vector<1x4x7x7xf32> to vector<4x7x7xf32>
    %630 = vector.shape_cast %627 : vector<4x7x7xf32> to vector<1x4x7x7xf32>
    tpu.vector_store %arg5[%c2_246, %c0_247, %c0_248, %c0_249], %630 {strides = array<i32>} : memref<3x4x7x7xf32, #tpu.memory_space<vmem>>, vector<1x4x7x7xf32>,
    return
  }
  func.func @transform_0(%arg0: i32, %arg1: i32, %arg2: memref<3xi32, #tpu.memory_space<smem>>, %arg3: memref<5x9xf32, #tpu.memory_space<smem>>) -> (i32, i32, i32, i32) {
    %0 = arith.index_cast %arg1 : i32 to index
    %1 = memref.load %arg2[%0] : memref<3xi32, #tpu.memory_space<smem>>
    %c0_i32 = arith.constant 0 : i32
    %c0_i32_0 = arith.constant 0 : i32
    %c0_i32_1 = arith.constant 0 : i32
    return %1, %arg0, %c0_i32, %c0_i32_0 : i32, i32, i32, i32
  }
  func.func @transform_1(%arg0: i32, %arg1: i32, %arg2: memref<3xi32, #tpu.memory_space<smem>>, %arg3: memref<5x9xf32, #tpu.memory_space<smem>>) -> (i32, i32, i32, i32) {
    %c0_i32 = arith.constant 0 : i32
    %c0_i32_0 = arith.constant 0 : i32
    %c0_i32_1 = arith.constant 0 : i32
    return %arg1, %arg0, %c0_i32, %c0_i32_0 : i32, i32, i32, i32
  }
}

</mosaic_0001>

<llo_original>
// kernel: tpu_custom_call.1
$region0: #{tpu_custom_call.1}
  #allocation0 [shape = 'u32[]', space=smem, size = 0x4, offset = 0x4, fixed_abs, tag = 'smem constant byte address 0x4 - core index']
  #allocation1 [shape = 'u32[72,128]{1,0:T(1,128)}', space=vmem, size = 0x9000, scoped, tag = 'internal scratch']
  #allocation2 [shape = 's32[1]{0}', space=sflag, size = 0x4, scoped, tag = 'scoped memory for tpu_custom_call.1']
  #allocation3 [shape = 'u8[512]{0}', space=smem, size = 0x200, scoped, tag = 'prefetched SMEM operand 0']
  #allocation4 [shape = 'u8[4096]{0}', space=smem, size = 0x1000, scoped, tag = 'prefetched SMEM operand 1']
  %s0 = inlined_call_operand.hbm [shape: s32[3], index: 0, kind: input, shape index: {}]
  %s1 = inlined_call_operand.hbm [shape: f32[5,9], index: 1, kind: input, shape index: {}]
  %s2 = inlined_call_operand.hbm [shape: f32[2,4,16,16], index: 2, kind: input, shape index: {}]
  %s3 = inlined_call_operand.vmem [shape: f32[9,4,7,7], index: 3, kind: output, shape index: {}]
  %s4 = sld [smem:[#allocation0]]
  $region41: #{tpu_custom_call.1} parent=0
    _
  %s6 = ssub.s32 1, %s4
  %s7 = scalar_select 0, %s6, %s4
  %s9 = sshll.u32 %s0, 4
  %s10 = int_to_ptr.hbm [resolvable:$true] %s9
  %12 = dma.hbm_to_smem %s10, 16, [#allocation3], [#allocation2]
  %s14 = sshll.u32 %s1, 4
  %s15 = int_to_ptr.hbm [resolvable:$true] %s14
  %17 = dma.hbm_to_smem %s15, 128, [#allocation4], [#allocation2]
  %19 = dma.done [#allocation2], 144
  %20 = sfence
  $region1: #{tpu_custom_call.1} parent=0
    #allocation5 [shape = 'u8[65536]{0}', space=vmem, size = 0x10000, scoped, tag = 'input window, operand 2']
    #allocation6 [shape = 's32[2]{0}', space=sflag, size = 0x8, scoped, tag = 'scoped memory for tpu_custom_call.1']
    %21 = vsyncpa [#allocation6], 0
    %s22 = scalar_lea.sflag [#allocation6], 1
    %23 = vsyncpa %s22, 0
    loop: start=0, step=1, limit=5
    $region2: #{tpu_custom_call.1} parent=1 // loop_pre_header
      _
    $region3: #{tpu_custom_call.1} parent=1 // loop_header
      %s25 = sphi 0, %s29
      %p26 = scmp.ge.s32.totalorder %s25, 5
      %s32 = sphi 0, %s44
      %s33 = sphi 0, %s40
      %s34 = sphi 0, %s32
      %s35 = sphi 0, %s33
      %s36 = sphi 0, %s34
      %s37 = sphi 0, %s35
      %s51 = sphi 0, %s53
      %s54 = sphi 0, %s51
      %s55 = sphi 0, %s54
      %s71 = sphi 0, %s55
      %s79 = sphi 0, %s81
      %s82 = sphi 0, %s79
      %s83 = sphi 0, %s82
      %s99 = sphi 0, %s83
    $region4: #{tpu_custom_call.1} parent=1 // loop_header_branch
      %28 = sbr.rel (%p26) target = $region8
    $region5: #{tpu_custom_call.1} parent=1 // loop_body
      %s30 = ssub.s32 %s25, 1
      %s31 = ssub.s32 %s25, 2
      %s38 = sadd.s32 1, %s33
      %p39 = scmp.ge.s32.totalorder %s38, 3
      %s40 = scalar_select %p39, 0, %s38
      %s41 = sadd.s32 1, %s32
      %s42 = scalar_select %p39, %s41, %s32
      %p43 = scmp.ge.s32.totalorder %s42, 1
      %s44 = scalar_select %p43, 0, %s42
      %s45 = sld [smem:[#allocation3 + %s33]]
      %s46 = sld [smem:[#allocation3 + %s40]]
      %s47 = ssub.s32 %s45, %s46
      %s48 = ssub.s32 %s32, %s44
      %s49 = sor.u32 %s47, %s48
      %p50 = scmp.eq.s32.totalorder %s49, 0
      %s52 = sadd.s32 %s51, 1
      %s53 = scalar_select %p50, %s51, %s52
      %p56 = pneg %p50
      %p57 = scmp.eq.s32.totalorder %s25, 2
      %p58 = por %p56, %p57
      %p59 = scmp.ne.s32.totalorder %s51, %s54
      %p60 = scmp.eq.s32.totalorder %s25, 0
      %p61 = por %p59, %p60
      %p62 = scmp.ne.s32.totalorder %s51, %s54
      %p63 = scmp.eq.s32.totalorder %s30, 2
      %p64 = por %p62, %p63
      %p65 = scmp.ne.s32.totalorder %s54, %s55
      %p66 = scmp.eq.s32.totalorder %s30, 0
      %p67 = por %p65, %p66
      %p68 = scmp.ne.s32.totalorder %s54, %s55
      %p69 = scmp.eq.s32.totalorder %s31, 2
      %p70 = por %p68, %p69
      %p72 = scmp.ne.s32.totalorder %s55, %s71
      %p73 = scmp.eq.s32.totalorder %s31, 0
      %p74 = por %p72, %p73
      %s75 = ssub.s32 %s33, %s40
      %s76 = ssub.s32 %s32, %s44
      %s77 = sor.u32 %s75, %s76
      %p78 = scmp.eq.s32.totalorder %s77, 0
      %s80 = sadd.s32 %s79, 1
      %s81 = scalar_select %p78, %s79, %s80
      %p84 = pneg %p78
      %p85 = scmp.eq.s32.totalorder %s25, 2
      %p86 = por %p84, %p85
      %p87 = scmp.ne.s32.totalorder %s79, %s82
      %p88 = scmp.eq.s32.totalorder %s25, 0
      %p89 = por %p87, %p88
      %p90 = scmp.ne.s32.totalorder %s79, %s82
      %p91 = scmp.eq.s32.totalorder %s30, 2
      %p92 = por %p90, %p91
      %p93 = scmp.ne.s32.totalorder %s82, %s83
      %p94 = scmp.eq.s32.totalorder %s30, 0
      %p95 = por %p93, %p94
      %p96 = scmp.ne.s32.totalorder %s82, %s83
      %p97 = scmp.eq.s32.totalorder %s31, 2
      %p98 = por %p96, %p97
      %p100 = scmp.ne.s32.totalorder %s83, %s99
      %p101 = scmp.eq.s32.totalorder %s31, 0
      %p102 = por %p100, %p101
      %p103 = scmp.le.s32.totalorder 1, %s25
      %p104 = scmp.lt.s32.totalorder %s25, 4
      %p105 = pnand %p103, %p104
      %p106 = pneg %p105
      // Predicated region
      $region9: #{tpu_custom_call.1} parent=5 // pred_check
        _
      $region10: #{tpu_custom_call.1} parent=5 // pred_check_branch
        %108 = sbr.rel (%p105) target = $region12
      $region11: #{tpu_custom_call.1} parent=5 // pred_region
        %s109 = ssub.s32 %s25, 1
      $region12: #{tpu_custom_call.1} parent=5 // pred_fallthru
        _
      %p110 = scmp.lt.s32.totalorder %s25, 3
      // Predicated region
      $region13: #{tpu_custom_call.1} parent=5 // pred_check
        %p111 = pneg %p110
      $region14: #{tpu_custom_call.1} parent=5 // pred_check_branch
        %113 = sbr.rel (%p111) target = $region16
      $region15: #{tpu_custom_call.1} parent=5 // pred_region
        // Predicated region
        $region17: #{tpu_custom_call.1} parent=15 // pred_check
          %p114 = pneg %p61
        $region18: #{tpu_custom_call.1} parent=15 // pred_check_branch
          %116 = sbr.rel (%p114) target = $region20
        $region19: #{tpu_custom_call.1} parent=15 // pred_region
          %s117 = sand.u32 %s51, 1
          %s118 = scalar_lea.sflag [#allocation6], %s117
          %s119 = sand.u32 %s51, 1
          %s120 = smul.addr %s119, 64
          %s121 = scalar_lea.vmem [#allocation5], %s120
          %s122 = sld [smem:[#allocation3 + %s33]]
          %s123 = smul.u32 4, %s32
          %125 = vsyncadd %s118, 0
          %s126 = smul.addr %s123, 2
          %s127 = smul.addr %s122, 8
          %s128 = sadd.s32 %s126, %s127
          %s129 = smul.addr %s128, 8
          %s130 = scalar_lea.hbm %s2, %s129
          %s131 = sshll.u32 %s130, 4
          %s132 = int_to_ptr.hbm [resolvable:$true] %s131
          %s133 = sshll.u32 %s121, 4
          %s134 = int_to_ptr.vmem [resolvable:$true] %s133
          %139 = dma.hbm_to_vmem [thread:$0]  %s132, 1024, %s134, %s118, 128, 128, 8
        $region20: #{tpu_custom_call.1} parent=15 // pred_fallthru
          _
      $region16: #{tpu_custom_call.1} parent=5 // pred_fallthru
        _
      %p140 = scmp.le.s32.totalorder 1, %s25
      %p141 = scmp.lt.s32.totalorder %s25, 4
      %p142 = pnand %p140, %p141
      %p143 = pneg %p142
      // Predicated region
      $region21: #{tpu_custom_call.1} parent=5 // pred_check
        _
      $region22: #{tpu_custom_call.1} parent=5 // pred_check_branch
        %145 = sbr.rel (%p142) target = $region24
      $region23: #{tpu_custom_call.1} parent=5 // pred_region
        %s146 = ssub.s32 %s25, 1
        %s147 = sand.u32 %s54, 1
        %s148 = scalar_lea.sflag [#allocation6], %s147
        %s149 = sand.u32 %s54, 1
        %s150 = smul.addr %s149, 64
        %s151 = scalar_lea.vmem [#allocation5], %s150
        // Predicated region
        $region25: #{tpu_custom_call.1} parent=23 // pred_check
          %p152 = pneg %p67
        $region26: #{tpu_custom_call.1} parent=23 // pred_check_branch
          %154 = sbr.rel (%p152) target = $region28
        $region27: #{tpu_custom_call.1} parent=23 // pred_region
          %156 = dma.done %s148, 1024
        $region28: #{tpu_custom_call.1} parent=23 // pred_fallthru
          _
        %s157 = sand.u32 %s54, 1
        %s158 = scalar_lea.sflag [#allocation6], %s157
        %s159 = sand.u32 %s54, 1
        %s160 = smul.addr %s159, 64
        %s161 = scalar_lea.vmem [#allocation5], %s160
        %p162 = pneg %p67
        %p163 = pneg %p64
        %p164 = pneg %p95
        %p165 = pneg %p92
        %s166 = smul.u32 3, %s35
        %s167 = smul.u32 4, %s34
        %p168 = scmp.lt.s32.totalorder %s166, 8
        %s169 = scalar_select %p168, %s166, 8
        %p170 = scmp.lt.s32.totalorder %s167, 3
        %s171 = scalar_select %p170, %s167, 3
        %s172 = smul.addr %s169, 4
        %s173 = sadd.s32 %s171, %s172
        %s174 = smul.addr %s173, 8
        %s175 = scalar_lea.vmem %s3, %s174
        %s176 = sld [smem:[#allocation3 + %s35]]
        %s177 = smul.u32 4, %s34
        %s178 = smul.u32 3, %s35
        %s179 = smul.u32 4, %s34
        %p180 = scmp.lt.s32.totalorder %s178, 8
        %s181 = scalar_select %p180, %s178, 8
        %p182 = scmp.lt.s32.totalorder %s179, 3
        %s183 = scalar_select %p182, %s179, 3
        %s184 = smul.addr %s181, 4
        %s185 = sadd.s32 %s183, %s184
        %s186 = smul.addr %s185, 8
        %s187 = scalar_lea.vmem %s3, %s186
        %s188 = smul.u32 3, %s35
        %s189 = smul.u32 4, %s34
        %v190 = vld [vmem:[%s151] sm:$0xff]
        %v191 = vld [vmem:[%s151 + $0x8] sm:$0xff]
        %v192 = vld [vmem:[%s151 + $0x10] sm:$0xff]
        %v193 = vld [vmem:[%s151 + $0x18] sm:$0xff]
        %v194 = vld [vmem:[%s151 + $0x20] sm:$0xff]
        %v195 = vld [vmem:[%s151 + $0x28] sm:$0xff]
        %v196 = vld [vmem:[%s151 + $0x30] sm:$0xff]
        %v197 = vld [vmem:[%s151 + $0x38] sm:$0xff]
        %s198 = smul.u32 %s35, 3
        %s199 = sshra.s32 %s198, 7
        %s200 = sand.u32 %s198, 127
        %s201 = sadd.s32 %s199, 1
        %s202 = smul.u32 %s201, 128
        %s203 = sshra.s32 %s198, 7
        %s204 = sand.u32 %s198, 127
        %s205 = sadd.s32 %s202, %s204
        %s206 = sld [smem:[#allocation4 + %s205]]
        %s207 = smul.f32 %s206, 0.25
        %s208 = ssub.f32 %s207, 0.5
        %s209 = sadd.s32 %s199, 2
        %s210 = smul.u32 %s209, 128
        %s211 = sadd.s32 %s210, %s204
        %s212 = sld [smem:[#allocation4 + %s211]]
        %s213 = smul.f32 %s212, 0.25
        %s214 = ssub.f32 %s213, 0.5
        %s215 = sadd.s32 %s199, 3
        %s216 = smul.u32 %s215, 128
        %s217 = sadd.s32 %s216, %s204
        %s218 = sld [smem:[#allocation4 + %s217]]
        %s219 = smul.f32 %s218, 0.25
        %s220 = ssub.f32 %s219, 0.5
        %s221 = sadd.s32 %s199, 4
        %s222 = smul.u32 %s221, 128
        %s223 = sadd.s32 %s222, %s204
        %s224 = sld [smem:[#allocation4 + %s223]]
        %s225 = smul.f32 %s224, 0.25
        %s226 = ssub.f32 %s225, 0.5
        %s227 = ssub.f32 %s220, %s208
        %s228 = ssub.f32 %s226, %s214
        %v229 = vrcp.pop 7.0
        %v230 = vmul.f32 7.0, %v229
        %v231 = vsub.f32 1.0, %v230
        %v232 = vmul.f32 %v229, %v231
        %v233 = vadd.f32 %v229, %v232
        %vm234 = vweird.f32 %v229
        %v235 = vsel %vm234, %v229, %v233
        %s236 = vtos %v235
        %s237 = smul.f32 %s228, %s236
        %v238 = vlaneseq
        %v239 = vshrl.u32 %v238, 7
        %v240 = vcvt.s32.f32 %v239
        %v241 = vlaneseq
        %v242 = vand.u32 %v241, 127
        %v243 = vcvt.s32.f32 %v242
        %v244 = vstv %s237
        %v245 = vmul.f32 %v240, %v244
        %v246 = vstv %s214
        %v247 = vadd.f32 %v246, %v245
        %s248 = smul.f32 %s237, 0.5
        %v249 = vrcp.pop 2.0
        %v250 = vmul.f32 2.0, %v249
        %v251 = vsub.f32 1.0, %v250
        %v252 = vmul.f32 %v249, %v251
        %v253 = vadd.f32 %v249, %v252
        %vm254 = vweird.f32 %v249
        %v255 = vsel %vm254, %v249, %v253
        %s256 = vtos %v255
        %s257 = smul.f32 %s248, %s256
        %v258 = vstv %s257
        %v259 = vadd.f32 %v247, %v258
        %vm260 = vcmp.ge.f32.partialorder %v259, -1.0
        %vm261 = vcmp.le.f32.partialorder %v259, 16.0
        %vm262 = vmand %vm260, %vm261
        %v263 = vmax.f32 %v259, 0.0
        %v264 = vmin.f32 %v263, 16.0
        %v265 = vfloor.f32 %v264
        %vm266 = vcmp.ge.f32.partialorder %v265, 15.0
        %v267 = vsel %vm266, 15.0, %v265
        %v268 = vadd.f32 %v265, 1.0
        %v269 = vsel %vm266, 15.0, %v268
        %v270 = vsel %vm266, 15.0, %v264
        %v271 = vsub.f32 %v270, %v267
        %v272 = vsub.f32 1.0, %v271
        %vm273 = vcmp.eq.f32.partialorder %v243, %v267
        %v274 = vsel %vm273, %v272, 0.0
        %vm275 = vcmp.eq.f32.partialorder %v243, %v269
        %v276 = vsel %vm275, %v271, 0.0
        %v277 = vadd.f32 %v274, %v276
        %v278 = vsel %vm262, %v277, 0.0
        %v279 = vadd.f32 %v278, 0.0
        %s280 = smul.f32 %s237, 1.5
        %v281 = vrcp.pop 2.0
        %v282 = vmul.f32 2.0, %v281
        %v283 = vsub.f32 1.0, %v282
        %v284 = vmul.f32 %v281, %v283
        %v285 = vadd.f32 %v281, %v284
        %vm286 = vweird.f32 %v281
        %v287 = vsel %vm286, %v281, %v285
        %s288 = vtos %v287
        %s289 = smul.f32 %s280, %s288
        %v290 = vstv %s289
        %v291 = vadd.f32 %v247, %v290
        %vm292 = vcmp.ge.f32.partialorder %v291, -1.0
        %vm293 = vcmp.le.f32.partialorder %v291, 16.0
        %vm294 = vmand %vm292, %vm293
        %v295 = vmax.f32 %v291, 0.0
        %v296 = vmin.f32 %v295, 16.0
        %v297 = vfloor.f32 %v296
        %vm298 = vcmp.ge.f32.partialorder %v297, 15.0
        %v299 = vsel %vm298, 15.0, %v297
        %v300 = vadd.f32 %v297, 1.0
        %v301 = vsel %vm298, 15.0, %v300
        %v302 = vsel %vm298, 15.0, %v296
        %v303 = vsub.f32 %v302, %v299
        %v304 = vsub.f32 1.0, %v303
        %vm305 = vcmp.eq.f32.partialorder %v243, %v299
        %v306 = vsel %vm305, %v304, 0.0
        %vm307 = vcmp.eq.f32.partialorder %v243, %v301
        %v308 = vsel %vm307, %v303, 0.0
        %v309 = vadd.f32 %v306, %v308
        %v310 = vsel %vm294, %v309, 0.0
        %v311 = vadd.f32 %v279, %v310
        %v312 = vmul.f32 %v311, 0.5
        %v313 = vrcp.pop 7.0
        %v314 = vmul.f32 7.0, %v313
        %v315 = vsub.f32 1.0, %v314
        %v316 = vmul.f32 %v313, %v315
        %v317 = vadd.f32 %v313, %v316
        %vm318 = vweird.f32 %v313
        %v319 = vsel %vm318, %v313, %v317
        %s320 = vtos %v319
        %s321 = smul.f32 %s227, %s320
        %v322 = vadd.s32 %v239, 8
        %v323 = vcvt.s32.f32 %v322
        %v324 = vstv %s321
        %v325 = vmul.f32 %v243, %v324
        %v326 = vstv %s208
        %v327 = vadd.f32 %v326, %v325
        %s328 = smul.f32 %s321, 0.5
        %v329 = vrcp.pop 2.0
        %v330 = vmul.f32 2.0, %v329
        %v331 = vsub.f32 1.0, %v330
        %v332 = vmul.f32 %v329, %v331
        %v333 = vadd.f32 %v329, %v332
        %vm334 = vweird.f32 %v329
        %v335 = vsel %vm334, %v329, %v333
        %s336 = vtos %v335
        %s337 = smul.f32 %s328, %s336
        %v338 = vstv %s337
        %v339 = vadd.f32 %v327, %v338
        %vm340 = vcmp.ge.f32.partialorder %v339, -1.0
        %vm341 = vcmp.le.f32.partialorder %v339, 16.0
        %vm342 = vmand %vm340, %vm341
        %v343 = vmax.f32 %v339, 0.0
        %v344 = vmin.f32 %v343, 16.0
        %v345 = vfloor.f32 %v344
        %vm346 = vcmp.ge.f32.partialorder %v345, 15.0
        %v347 = vsel %vm346, 15.0, %v345
        %v348 = vadd.f32 %v345, 1.0
        %v349 = vsel %vm346, 15.0, %v348
        %v350 = vsel %vm346, 15.0, %v344
        %v351 = vsub.f32 %v350, %v347
        %v352 = vsub.f32 1.0, %v351
        %vm353 = vcmp.eq.f32.partialorder %v240, %v347
        %vm354 = vcmp.eq.f32.partialorder %v323, %v347
        %v355 = vsel %vm353, %v352, 0.0
        %v356 = vsel %vm354, %v352, 0.0
        %vm357 = vcmp.eq.f32.partialorder %v240, %v349
        %vm358 = vcmp.eq.f32.partialorder %v323, %v349
        %v359 = vsel %vm357, %v351, 0.0
        %v360 = vsel %vm358, %v351, 0.0
        %v361 = vadd.f32 %v355, %v359
        %v362 = vadd.f32 %v356, %v360
        %v363 = vsel %vm342, %v361, 0.0
        %v364 = vsel %vm342, %v362, 0.0
        %v365 = vadd.f32 %v363, 0.0
        %v366 = vadd.f32 %v364, 0.0
        %s367 = smul.f32 %s321, 1.5
        %v368 = vrcp.pop 2.0
        %v369 = vmul.f32 2.0, %v368
        %v370 = vsub.f32 1.0, %v369
        %v371 = vmul.f32 %v368, %v370
        %v372 = vadd.f32 %v368, %v371
        %vm373 = vweird.f32 %v368
        %v374 = vsel %vm373, %v368, %v372
        %s375 = vtos %v374
        %s376 = smul.f32 %s367, %s375
        %v377 = vstv %s376
        %v378 = vadd.f32 %v327, %v377
        %vm379 = vcmp.ge.f32.partialorder %v378, -1.0
        %vm380 = vcmp.le.f32.partialorder %v378, 16.0
        %vm381 = vmand %vm379, %vm380
        %v382 = vmax.f32 %v378, 0.0
        %v383 = vmin.f32 %v382, 16.0
        %v384 = vfloor.f32 %v383
        %vm385 = vcmp.ge.f32.partialorder %v384, 15.0
        %v386 = vsel %vm385, 15.0, %v384
        %v387 = vadd.f32 %v384, 1.0
        %v388 = vsel %vm385, 15.0, %v387
        %v389 = vsel %vm385, 15.0, %v383
        %v390 = vsub.f32 %v389, %v386
        %v391 = vsub.f32 1.0, %v390
        %vm392 = vcmp.eq.f32.partialorder %v240, %v386
        %vm393 = vcmp.eq.f32.partialorder %v323, %v386
        %v394 = vsel %vm392, %v391, 0.0
        %v395 = vsel %vm393, %v391, 0.0
        %vm396 = vcmp.eq.f32.partialorder %v240, %v388
        %vm397 = vcmp.eq.f32.partialorder %v323, %v388
        %v398 = vsel %vm396, %v390, 0.0
        %v399 = vsel %vm397, %v390, 0.0
        %v400 = vadd.f32 %v394, %v398
        %v401 = vadd.f32 %v395, %v399
        %v402 = vsel %vm381, %v400, 0.0
        %v403 = vsel %vm381, %v401, 0.0
        %v404 = vadd.f32 %v365, %v402
        %v405 = vadd.f32 %v366, %v403
        %v406 = vmul.f32 %v404, 0.5
        %v407 = vmul.f32 %v405, 0.5
        %s408 = sadd.s32 %s198, 1
        %s409 = sshra.s32 %s408, 7
        %s410 = sand.u32 %s408, 127
        %s411 = sadd.s32 %s409, 1
        %s412 = smul.u32 %s411, 128
        %s413 = sshra.s32 %s408, 7
        %s414 = sand.u32 %s408, 127
        %s415 = sadd.s32 %s412, %s414
        %s416 = sld [smem:[#allocation4 + %s415]]
        %s417 = smul.f32 %s416, 0.25
        %s418 = ssub.f32 %s417, 0.5
        %s419 = sadd.s32 %s409, 2
        %s420 = smul.u32 %s419, 128
        %s421 = sadd.s32 %s420, %s414
        %s422 = sld [smem:[#allocation4 + %s421]]
        %s423 = smul.f32 %s422, 0.25
        %s424 = ssub.f32 %s423, 0.5
        %s425 = sadd.s32 %s409, 3
        %s426 = smul.u32 %s425, 128
        %s427 = sadd.s32 %s426, %s414
        %s428 = sld [smem:[#allocation4 + %s427]]
        %s429 = smul.f32 %s428, 0.25
        %s430 = ssub.f32 %s429, 0.5
        %s431 = sadd.s32 %s409, 4
        %s432 = smul.u32 %s431, 128
        %s433 = sadd.s32 %s432, %s414
        %s434 = sld [smem:[#allocation4 + %s433]]
        %s435 = smul.f32 %s434, 0.25
        %s436 = ssub.f32 %s435, 0.5
        %s437 = ssub.f32 %s430, %s418
        %s438 = ssub.f32 %s436, %s424
        %v439 = vrcp.pop 7.0
        %v440 = vmul.f32 7.0, %v439
        %v441 = vsub.f32 1.0, %v440
        %v442 = vmul.f32 %v439, %v441
        %v443 = vadd.f32 %v439, %v442
        %vm444 = vweird.f32 %v439
        %v445 = vsel %vm444, %v439, %v443
        %s446 = vtos %v445
        %s447 = smul.f32 %s438, %s446
        %v448 = vstv %s447
        %v449 = vmul.f32 %v240, %v448
        %v450 = vstv %s424
        %v451 = vadd.f32 %v450, %v449
        %s452 = smul.f32 %s447, 0.5
        %v453 = vrcp.pop 2.0
        %v454 = vmul.f32 2.0, %v453
        %v455 = vsub.f32 1.0, %v454
        %v456 = vmul.f32 %v453, %v455
        %v457 = vadd.f32 %v453, %v456
        %vm458 = vweird.f32 %v453
        %v459 = vsel %vm458, %v453, %v457
        %s460 = vtos %v459
        %s461 = smul.f32 %s452, %s460
        %v462 = vstv %s461
        %v463 = vadd.f32 %v451, %v462
        %vm464 = vcmp.ge.f32.partialorder %v463, -1.0
        %vm465 = vcmp.le.f32.partialorder %v463, 16.0
        %vm466 = vmand %vm464, %vm465
        %v467 = vmax.f32 %v463, 0.0
        %v468 = vmin.f32 %v467, 16.0
        %v469 = vfloor.f32 %v468
        %vm470 = vcmp.ge.f32.partialorder %v469, 15.0
        %v471 = vsel %vm470, 15.0, %v469
        %v472 = vadd.f32 %v469, 1.0
        %v473 = vsel %vm470, 15.0, %v472
        %v474 = vsel %vm470, 15.0, %v468
        %v475 = vsub.f32 %v474, %v471
        %v476 = vsub.f32 1.0, %v475
        %vm477 = vcmp.eq.f32.partialorder %v243, %v471
        %v478 = vsel %vm477, %v476, 0.0
        %vm479 = vcmp.eq.f32.partialorder %v243, %v473
        %v480 = vsel %vm479, %v475, 0.0
        %v481 = vadd.f32 %v478, %v480
        %v482 = vsel %vm466, %v481, 0.0
        %v483 = vadd.f32 %v482, 0.0
        %s484 = smul.f32 %s447, 1.5
        %v485 = vrcp.pop 2.0
        %v486 = vmul.f32 2.0, %v485
        %v487 = vsub.f32 1.0, %v486
        %v488 = vmul.f32 %v485, %v487
        %v489 = vadd.f32 %v485, %v488
        %vm490 = vweird.f32 %v485
        %v491 = vsel %vm490, %v485, %v489
        %s492 = vtos %v491
        %s493 = smul.f32 %s484, %s492
        %v494 = vstv %s493
        %v495 = vadd.f32 %v451, %v494
        %vm496 = vcmp.ge.f32.partialorder %v495, -1.0
        %vm497 = vcmp.le.f32.partialorder %v495, 16.0
        %vm498 = vmand %vm496, %vm497
        %v499 = vmax.f32 %v495, 0.0
        %v500 = vmin.f32 %v499, 16.0
        %v501 = vfloor.f32 %v500
        %vm502 = vcmp.ge.f32.partialorder %v501, 15.0
        %v503 = vsel %vm502, 15.0, %v501
        %v504 = vadd.f32 %v501, 1.0
        %v505 = vsel %vm502, 15.0, %v504
        %v506 = vsel %vm502, 15.0, %v500
        %v507 = vsub.f32 %v506, %v503
        %v508 = vsub.f32 1.0, %v507
        %vm509 = vcmp.eq.f32.partialorder %v243, %v503
        %v510 = vsel %vm509, %v508, 0.0
        %vm511 = vcmp.eq.f32.partialorder %v243, %v505
        %v512 = vsel %vm511, %v507, 0.0
        %v513 = vadd.f32 %v510, %v512
        %v514 = vsel %vm498, %v513, 0.0
        %v515 = vadd.f32 %v483, %v514
        %v516 = vmul.f32 %v515, 0.5
        %v517 = vrcp.pop 7.0
        %v518 = vmul.f32 7.0, %v517
        %v519 = vsub.f32 1.0, %v518
        %v520 = vmul.f32 %v517, %v519
        %v521 = vadd.f32 %v517, %v520
        %vm522 = vweird.f32 %v517
        %v523 = vsel %vm522, %v517, %v521
        %s524 = vtos %v523
        %s525 = smul.f32 %s437, %s524
        %v526 = vstv %s525
        %v527 = vmul.f32 %v243, %v526
        %v528 = vstv %s418
        %v529 = vadd.f32 %v528, %v527
        %s530 = smul.f32 %s525, 0.5
        %v531 = vrcp.pop 2.0
        %v532 = vmul.f32 2.0, %v531
        %v533 = vsub.f32 1.0, %v532
        %v534 = vmul.f32 %v531, %v533
        %v535 = vadd.f32 %v531, %v534
        %vm536 = vweird.f32 %v531
        %v537 = vsel %vm536, %v531, %v535
        %s538 = vtos %v537
        %s539 = smul.f32 %s530, %s538
        %v540 = vstv %s539
        %v541 = vadd.f32 %v529, %v540
        %vm542 = vcmp.ge.f32.partialorder %v541, -1.0
        %vm543 = vcmp.le.f32.partialorder %v541, 16.0
        %vm544 = vmand %vm542, %vm543
        %v545 = vmax.f32 %v541, 0.0
        %v546 = vmin.f32 %v545, 16.0
        %v547 = vfloor.f32 %v546
        %vm548 = vcmp.ge.f32.partialorder %v547, 15.0
        %v549 = vsel %vm548, 15.0, %v547
        %v550 = vadd.f32 %v547, 1.0
        %v551 = vsel %vm548, 15.0, %v550
        %v552 = vsel %vm548, 15.0, %v546
        %v553 = vsub.f32 %v552, %v549
        %v554 = vsub.f32 1.0, %v553
        %vm555 = vcmp.eq.f32.partialorder %v240, %v549
        %vm556 = vcmp.eq.f32.partialorder %v323, %v549
        %v557 = vsel %vm555, %v554, 0.0
        %v558 = vsel %vm556, %v554, 0.0
        %vm559 = vcmp.eq.f32.partialorder %v240, %v551
        %vm560 = vcmp.eq.f32.partialorder %v323, %v551
        %v561 = vsel %vm559, %v553, 0.0
        %v562 = vsel %vm560, %v553, 0.0
        %v563 = vadd.f32 %v557, %v561
        %v564 = vadd.f32 %v558, %v562
        %v565 = vsel %vm544, %v563, 0.0
        %v566 = vsel %vm544, %v564, 0.0
        %v567 = vadd.f32 %v565, 0.0
        %v568 = vadd.f32 %v566, 0.0
        %s569 = smul.f32 %s525, 1.5
        %v570 = vrcp.pop 2.0
        %v571 = vmul.f32 2.0, %v570
        %v572 = vsub.f32 1.0, %v571
        %v573 = vmul.f32 %v570, %v572
        %v574 = vadd.f32 %v570, %v573
        %vm575 = vweird.f32 %v570
        %v576 = vsel %vm575, %v570, %v574
        %s577 = vtos %v576
        %s578 = smul.f32 %s569, %s577
        %v579 = vstv %s578
        %v580 = vadd.f32 %v529, %v579
        %vm581 = vcmp.ge.f32.partialorder %v580, -1.0
        %vm582 = vcmp.le.f32.partialorder %v580, 16.0
        %vm583 = vmand %vm581, %vm582
        %v584 = vmax.f32 %v580, 0.0
        %v585 = vmin.f32 %v584, 16.0
        %v586 = vfloor.f32 %v585
        %vm587 = vcmp.ge.f32.partialorder %v586, 15.0
        %v588 = vsel %vm587, 15.0, %v586
        %v589 = vadd.f32 %v586, 1.0
        %v590 = vsel %vm587, 15.0, %v589
        %v591 = vsel %vm587, 15.0, %v585
        %v592 = vsub.f32 %v591, %v588
        %v593 = vsub.f32 1.0, %v592
        %vm594 = vcmp.eq.f32.partialorder %v240, %v588
        %vm595 = vcmp.eq.f32.partialorder %v323, %v588
        %v596 = vsel %vm594, %v593, 0.0
        %v597 = vsel %vm595, %v593, 0.0
        %vm598 = vcmp.eq.f32.partialorder %v240, %v590
        %vm599 = vcmp.eq.f32.partialorder %v323, %v590
        %v600 = vsel %vm598, %v592, 0.0
        %v601 = vsel %vm599, %v592, 0.0
        %v602 = vadd.f32 %v596, %v600
        %v603 = vadd.f32 %v597, %v601
        %v604 = vsel %vm583, %v602, 0.0
        %v605 = vsel %vm583, %v603, 0.0
        %v606 = vadd.f32 %v567, %v604
        %v607 = vadd.f32 %v568, %v605
        %v608 = vmul.f32 %v606, 0.5
        %v609 = vmul.f32 %v607, 0.5
        %s610 = sadd.s32 %s198, 2
        %s611 = sshra.s32 %s610, 7
        %s612 = sand.u32 %s610, 127
        %s613 = sadd.s32 %s611, 1
        %s614 = smul.u32 %s613, 128
        %s615 = sshra.s32 %s610, 7
        %s616 = sand.u32 %s610, 127
        %s617 = sadd.s32 %s614, %s616
        %s618 = sld [smem:[#allocation4 + %s617]]
        %s619 = smul.f32 %s618, 0.25
        %s620 = ssub.f32 %s619, 0.5
        %s621 = sadd.s32 %s611, 2
        %s622 = smul.u32 %s621, 128
        %s623 = sadd.s32 %s622, %s616
        %s624 = sld [smem:[#allocation4 + %s623]]
        %s625 = smul.f32 %s624, 0.25
        %s626 = ssub.f32 %s625, 0.5
        %s627 = sadd.s32 %s611, 3
        %s628 = smul.u32 %s627, 128
        %s629 = sadd.s32 %s628, %s616
        %s630 = sld [smem:[#allocation4 + %s629]]
        %s631 = smul.f32 %s630, 0.25
        %s632 = ssub.f32 %s631, 0.5
        %s633 = sadd.s32 %s611, 4
        %s634 = smul.u32 %s633, 128
        %s635 = sadd.s32 %s634, %s616
        %s636 = sld [smem:[#allocation4 + %s635]]
        %s637 = smul.f32 %s636, 0.25
        %s638 = ssub.f32 %s637, 0.5
        %s639 = ssub.f32 %s632, %s620
        %s640 = ssub.f32 %s638, %s626
        %v641 = vrcp.pop 7.0
        %v642 = vmul.f32 7.0, %v641
        %v643 = vsub.f32 1.0, %v642
        %v644 = vmul.f32 %v641, %v643
        %v645 = vadd.f32 %v641, %v644
        %vm646 = vweird.f32 %v641
        %v647 = vsel %vm646, %v641, %v645
        %s648 = vtos %v647
        %s649 = smul.f32 %s640, %s648
        %v650 = vstv %s649
        %v651 = vmul.f32 %v240, %v650
        %v652 = vstv %s626
        %v653 = vadd.f32 %v652, %v651
        %s654 = smul.f32 %s649, 0.5
        %v655 = vrcp.pop 2.0
        %v656 = vmul.f32 2.0, %v655
        %v657 = vsub.f32 1.0, %v656
        %v658 = vmul.f32 %v655, %v657
        %v659 = vadd.f32 %v655, %v658
        %vm660 = vweird.f32 %v655
        %v661 = vsel %vm660, %v655, %v659
        %s662 = vtos %v661
        %s663 = smul.f32 %s654, %s662
        %v664 = vstv %s663
        %v665 = vadd.f32 %v653, %v664
        %vm666 = vcmp.ge.f32.partialorder %v665, -1.0
        %vm667 = vcmp.le.f32.partialorder %v665, 16.0
        %vm668 = vmand %vm666, %vm667
        %v669 = vmax.f32 %v665, 0.0
        %v670 = vmin.f32 %v669, 16.0
        %v671 = vfloor.f32 %v670
        %vm672 = vcmp.ge.f32.partialorder %v671, 15.0
        %v673 = vsel %vm672, 15.0, %v671
        %v674 = vadd.f32 %v671, 1.0
        %v675 = vsel %vm672, 15.0, %v674
        %v676 = vsel %vm672, 15.0, %v670
        %v677 = vsub.f32 %v676, %v673
        %v678 = vsub.f32 1.0, %v677
        %vm679 = vcmp.eq.f32.partialorder %v243, %v673
        %v680 = vsel %vm679, %v678, 0.0
        %vm681 = vcmp.eq.f32.partialorder %v243, %v675
        %v682 = vsel %vm681, %v677, 0.0
        %v683 = vadd.f32 %v680, %v682
        %v684 = vsel %vm668, %v683, 0.0
        %v685 = vadd.f32 %v684, 0.0
        %s686 = smul.f32 %s649, 1.5
        %v687 = vrcp.pop 2.0
        %v688 = vmul.f32 2.0, %v687
        %v689 = vsub.f32 1.0, %v688
        %v690 = vmul.f32 %v687, %v689
        %v691 = vadd.f32 %v687, %v690
        %vm692 = vweird.f32 %v687
        %v693 = vsel %vm692, %v687, %v691
        %s694 = vtos %v693
        %s695 = smul.f32 %s686, %s694
        %v696 = vstv %s695
        %v697 = vadd.f32 %v653, %v696
        %vm698 = vcmp.ge.f32.partialorder %v697, -1.0
        %vm699 = vcmp.le.f32.partialorder %v697, 16.0
        %vm700 = vmand %vm698, %vm699
        %v701 = vmax.f32 %v697, 0.0
        %v702 = vmin.f32 %v701, 16.0
        %v703 = vfloor.f32 %v702
        %vm704 = vcmp.ge.f32.partialorder %v703, 15.0
        %v705 = vsel %vm704, 15.0, %v703
        %v706 = vadd.f32 %v703, 1.0
        %v707 = vsel %vm704, 15.0, %v706
        %v708 = vsel %vm704, 15.0, %v702
        %v709 = vsub.f32 %v708, %v705
        %v710 = vsub.f32 1.0, %v709
        %vm711 = vcmp.eq.f32.partialorder %v243, %v705
        %v712 = vsel %vm711, %v710, 0.0
        %vm713 = vcmp.eq.f32.partialorder %v243, %v707
        %v714 = vsel %vm713, %v709, 0.0
        %v715 = vadd.f32 %v712, %v714
        %v716 = vsel %vm700, %v715, 0.0
        %v717 = vadd.f32 %v685, %v716
        %v718 = vmul.f32 %v717, 0.5
        %v719 = vrcp.pop 7.0
        %v720 = vmul.f32 7.0, %v719
        %v721 = vsub.f32 1.0, %v720
        %v722 = vmul.f32 %v719, %v721
        %v723 = vadd.f32 %v719, %v722
        %vm724 = vweird.f32 %v719
        %v725 = vsel %vm724, %v719, %v723
        %s726 = vtos %v725
        %s727 = smul.f32 %s639, %s726
        %v728 = vstv %s727
        %v729 = vmul.f32 %v243, %v728
        %v730 = vstv %s620
        %v731 = vadd.f32 %v730, %v729
        %s732 = smul.f32 %s727, 0.5
        %v733 = vrcp.pop 2.0
        %v734 = vmul.f32 2.0, %v733
        %v735 = vsub.f32 1.0, %v734
        %v736 = vmul.f32 %v733, %v735
        %v737 = vadd.f32 %v733, %v736
        %vm738 = vweird.f32 %v733
        %v739 = vsel %vm738, %v733, %v737
        %s740 = vtos %v739
        %s741 = smul.f32 %s732, %s740
        %v742 = vstv %s741
        %v743 = vadd.f32 %v731, %v742
        %vm744 = vcmp.ge.f32.partialorder %v743, -1.0
        %vm745 = vcmp.le.f32.partialorder %v743, 16.0
        %vm746 = vmand %vm744, %vm745
        %v747 = vmax.f32 %v743, 0.0
        %v748 = vmin.f32 %v747, 16.0
        %v749 = vfloor.f32 %v748
        %vm750 = vcmp.ge.f32.partialorder %v749, 15.0
        %v751 = vsel %vm750, 15.0, %v749
        %v752 = vadd.f32 %v749, 1.0
        %v753 = vsel %vm750, 15.0, %v752
        %v754 = vsel %vm750, 15.0, %v748
        %v755 = vsub.f32 %v754, %v751
        %v756 = vsub.f32 1.0, %v755
        %vm757 = vcmp.eq.f32.partialorder %v240, %v751
        %vm758 = vcmp.eq.f32.partialorder %v323, %v751
        %v759 = vsel %vm757, %v756, 0.0
        %v760 = vsel %vm758, %v756, 0.0
        %vm761 = vcmp.eq.f32.partialorder %v240, %v753
        %vm762 = vcmp.eq.f32.partialorder %v323, %v753
        %v763 = vsel %vm761, %v755, 0.0
        %v764 = vsel %vm762, %v755, 0.0
        %v765 = vadd.f32 %v759, %v763
        %v766 = vadd.f32 %v760, %v764
        %v767 = vsel %vm746, %v765, 0.0
        %v768 = vsel %vm746, %v766, 0.0
        %v769 = vadd.f32 %v767, 0.0
        %v770 = vadd.f32 %v768, 0.0
        %s771 = smul.f32 %s727, 1.5
        %v772 = vrcp.pop 2.0
        %v773 = vmul.f32 2.0, %v772
        %v774 = vsub.f32 1.0, %v773
        %v775 = vmul.f32 %v772, %v774
        %v776 = vadd.f32 %v772, %v775
        %vm777 = vweird.f32 %v772
        %v778 = vsel %vm777, %v772, %v776
        %s779 = vtos %v778
        %s780 = smul.f32 %s771, %s779
        %v781 = vstv %s780
        %v782 = vadd.f32 %v731, %v781
        %vm783 = vcmp.ge.f32.partialorder %v782, -1.0
        %vm784 = vcmp.le.f32.partialorder %v782, 16.0
        %vm785 = vmand %vm783, %vm784
        %v786 = vmax.f32 %v782, 0.0
        %v787 = vmin.f32 %v786, 16.0
        %v788 = vfloor.f32 %v787
        %vm789 = vcmp.ge.f32.partialorder %v788, 15.0
        %v790 = vsel %vm789, 15.0, %v788
        %v791 = vadd.f32 %v788, 1.0
        %v792 = vsel %vm789, 15.0, %v791
        %v793 = vsel %vm789, 15.0, %v787
        %v794 = vsub.f32 %v793, %v790
        %v795 = vsub.f32 1.0, %v794
        %vm796 = vcmp.eq.f32.partialorder %v240, %v790
        %vm797 = vcmp.eq.f32.partialorder %v323, %v790
        %v798 = vsel %vm796, %v795, 0.0
        %v799 = vsel %vm797, %v795, 0.0
        %vm800 = vcmp.eq.f32.partialorder %v240, %v792
        %vm801 = vcmp.eq.f32.partialorder %v323, %v792
        %v802 = vsel %vm800, %v794, 0.0
        %v803 = vsel %vm801, %v794, 0.0
        %v804 = vadd.f32 %v798, %v802
        %v805 = vadd.f32 %v799, %v803
        %v806 = vsel %vm785, %v804, 0.0
        %v807 = vsel %vm785, %v805, 0.0
        %v808 = vadd.f32 %v769, %v806
        %v809 = vadd.f32 %v770, %v807
        %v810 = vmul.f32 %v808, 0.5
        %v811 = vmul.f32 %v809, 0.5
        %v813 = vrot.slane %v516, 1
        %v816 = vrot.slane %v718, 2
        %vm818 = vcmask 1046528
        %v819 = vsel %vm818, %v312, %v813
        %vm820 = vcmask 1045504
        %v821 = vsel %vm820, %v813, %v816
        %vm822 = vcmask 130048
        %v824 = vsel %vm822, %v819, 0
        %v827 = vsel %vm822, %v821, 0
        %v829 = vsel %vm822, %v816, 0
        %831 = vmatpush.msra.mxu0 0.0
        %832 = vmatpush.msra.mxu0 0.0
        %833 = vmatpush.msra.mxu0 0.0
        %834 = vmatpush.msra.mxu0 0.0
        %835 = vmatpush.msra.mxu0 0.0
        %836 = vmatpush.msra.mxu0 0.0
        %837 = vmatpush.msra.mxu0 0.0
        %838 = vmatpush.msra.mxu0 0.0
        %839 = vmatpush.msra.mxu0 0.0
        %840 = vmatpush.msra.mxu0 0.0
        %841 = vmatpush.msra.mxu0 0.0
        %842 = vmatpush.msra.mxu0 0.0
        %843 = vmatpush.msra.mxu0 0.0
        %844 = vmatpush.msra.mxu0 0.0
        %845 = vmatpush.msra.mxu0 %v191
        %846 = vmatpush.msra.mxu0 %v190
        %847 = vmatmul.f32.gmra.mxu0 %v824
        %v848 = vpop.f32.mrf.mxu0
        %v849 = vadd.f32 0.0, %v848
        %850 = vmatmul.f32.gmra.mxu0 %v827
        %v851 = vpop.f32.mrf.mxu0
        %v852 = vadd.f32 0.0, %v851
        %853 = vmatmul.f32.gmra.mxu0 %v829
        %v854 = vpop.f32.mrf.mxu0
        %v855 = vadd.f32 0.0, %v854
        %856 = vdwg.mxu0
        %857 = vmatpush.msra.mxu0 0.0
        %858 = vmatpush.msra.mxu0 0.0
        %859 = vmatpush.msra.mxu0 0.0
        %860 = vmatpush.msra.mxu0 0.0
        %861 = vmatpush.msra.mxu0 0.0
        %862 = vmatpush.msra.mxu0 0.0
        %863 = vmatpush.msra.mxu0 0.0
        %864 = vmatpush.msra.mxu0 0.0
        %865 = vmatpush.msra.mxu0 0.0
        %866 = vmatpush.msra.mxu0 0.0
        %867 = vmatpush.msra.mxu0 0.0
        %868 = vmatpush.msra.mxu0 0.0
        %869 = vmatpush.msra.mxu0 0.0
        %870 = vmatpush.msra.mxu0 0.0
        %871 = vmatpush.msra.mxu0 %v193
        %872 = vmatpush.msra.mxu0 %v192
        %873 = vmatmul.f32.gmra.mxu0 %v824
        %v874 = vpop.f32.mrf.mxu0
        %v875 = vadd.f32 0.0, %v874
        %876 = vmatmul.f32.gmra.mxu0 %v827
        %v877 = vpop.f32.mrf.mxu0
        %v878 = vadd.f32 0.0, %v877
        %879 = vmatmul.f32.gmra.mxu0 %v829
        %v880 = vpop.f32.mrf.mxu0
        %v881 = vadd.f32 0.0, %v880
        %882 = vdwg.mxu0
        %883 = vmatpush.msra.mxu0 0.0
        %884 = vmatpush.msra.mxu0 0.0
        %885 = vmatpush.msra.mxu0 0.0
        %886 = vmatpush.msra.mxu0 0.0
        %887 = vmatpush.msra.mxu0 0.0
        %888 = vmatpush.msra.mxu0 0.0
        %889 = vmatpush.msra.mxu0 0.0
        %890 = vmatpush.msra.mxu0 0.0
        %891 = vmatpush.msra.mxu0 0.0
        %892 = vmatpush.msra.mxu0 0.0
        %893 = vmatpush.msra.mxu0 0.0
        %894 = vmatpush.msra.mxu0 0.0
        %895 = vmatpush.msra.mxu0 0.0
        %896 = vmatpush.msra.mxu0 0.0
        %897 = vmatpush.msra.mxu0 %v195
        %898 = vmatpush.msra.mxu0 %v194
        %899 = vmatmul.f32.gmra.mxu0 %v824
        %v900 = vpop.f32.mrf.mxu0
        %v901 = vadd.f32 0.0, %v900
        %902 = vmatmul.f32.gmra.mxu0 %v827
        %v903 = vpop.f32.mrf.mxu0
        %v904 = vadd.f32 0.0, %v903
        %905 = vmatmul.f32.gmra.mxu0 %v829
        %v906 = vpop.f32.mrf.mxu0
        %v907 = vadd.f32 0.0, %v906
        %908 = vdwg.mxu0
        %909 = vmatpush.msra.mxu0 0.0
        %910 = vmatpush.msra.mxu0 0.0
        %911 = vmatpush.msra.mxu0 0.0
        %912 = vmatpush.msra.mxu0 0.0
        %913 = vmatpush.msra.mxu0 0.0
        %914 = vmatpush.msra.mxu0 0.0
        %915 = vmatpush.msra.mxu0 0.0
        %916 = vmatpush.msra.mxu0 0.0
        %917 = vmatpush.msra.mxu0 0.0
        %918 = vmatpush.msra.mxu0 0.0
        %919 = vmatpush.msra.mxu0 0.0
        %920 = vmatpush.msra.mxu0 0.0
        %921 = vmatpush.msra.mxu0 0.0
        %922 = vmatpush.msra.mxu0 0.0
        %923 = vmatpush.msra.mxu0 %v197
        %924 = vmatpush.msra.mxu0 %v196
        %925 = vmatmul.f32.gmra.mxu0 %v824
        %v926 = vpop.f32.mrf.mxu0
        %v927 = vadd.f32 0.0, %v926
        %928 = vmatmul.f32.gmra.mxu0 %v827
        %v929 = vpop.f32.mrf.mxu0
        %v930 = vadd.f32 0.0, %v929
        %931 = vmatmul.f32.gmra.mxu0 %v829
        %v932 = vpop.f32.mrf.mxu0
        %v933 = vadd.f32 0.0, %v932
        %934 = vdwg.mxu0
        %v936 = vsel %vm822, %v849, 0
        %938 = vmatpush.msra.mxu0 0.0
        %939 = vmatpush.msra.mxu0 0.0
        %940 = vmatpush.msra.mxu0 0.0
        %941 = vmatpush.msra.mxu0 0.0
        %942 = vmatpush.msra.mxu0 0.0
        %943 = vmatpush.msra.mxu0 0.0
        %944 = vmatpush.msra.mxu0 0.0
        %945 = vmatpush.msra.mxu0 0.0
        %946 = vmatpush.msra.mxu0 0.0
        %947 = vmatpush.msra.mxu0 0.0
        %948 = vmatpush.msra.mxu0 0.0
        %949 = vmatpush.msra.mxu0 0.0
        %950 = vmatpush.msra.mxu0 0.0
        %951 = vmatpush.msra.mxu0 0.0
        %952 = vmatpush.msra.mxu0 %v407
        %953 = vmatpush.msra.mxu0 %v406
        %954 = vmatmul.f32.gmra.mxu0 %v936
        %v955 = vpop.f32.mrf.mxu0
        %v956 = vadd.f32 0.0, %v955
        %957 = vdwg.mxu0
        %v959 = vsel %vm822, %v875, 0
        %961 = vmatpush.msra.mxu0 0.0
        %962 = vmatpush.msra.mxu0 0.0
        %963 = vmatpush.msra.mxu0 0.0
        %964 = vmatpush.msra.mxu0 0.0
        %965 = vmatpush.msra.mxu0 0.0
        %966 = vmatpush.msra.mxu0 0.0
        %967 = vmatpush.msra.mxu0 0.0
        %968 = vmatpush.msra.mxu0 0.0
        %969 = vmatpush.msra.mxu0 0.0
        %970 = vmatpush.msra.mxu0 0.0
        %971 = vmatpush.msra.mxu0 0.0
        %972 = vmatpush.msra.mxu0 0.0
        %973 = vmatpush.msra.mxu0 0.0
        %974 = vmatpush.msra.mxu0 0.0
        %975 = vmatpush.msra.mxu0 %v407
        %976 = vmatpush.msra.mxu0 %v406
        %977 = vmatmul.f32.gmra.mxu0 %v959
        %v978 = vpop.f32.mrf.mxu0
        %v979 = vadd.f32 0.0, %v978
        %980 = vdwg.mxu0
        %v982 = vsel %vm822, %v901, 0
        %984 = vmatpush.msra.mxu0 0.0
        %985 = vmatpush.msra.mxu0 0.0
        %986 = vmatpush.msra.mxu0 0.0
        %987 = vmatpush.msra.mxu0 0.0
        %988 = vmatpush.msra.mxu0 0.0
        %989 = vmatpush.msra.mxu0 0.0
        %990 = vmatpush.msra.mxu0 0.0
        %991 = vmatpush.msra.mxu0 0.0
        %992 = vmatpush.msra.mxu0 0.0
        %993 = vmatpush.msra.mxu0 0.0
        %994 = vmatpush.msra.mxu0 0.0
        %995 = vmatpush.msra.mxu0 0.0
        %996 = vmatpush.msra.mxu0 0.0
        %997 = vmatpush.msra.mxu0 0.0
        %998 = vmatpush.msra.mxu0 %v407
        %999 = vmatpush.msra.mxu0 %v406
        %1000 = vmatmul.f32.gmra.mxu0 %v982
        %v1001 = vpop.f32.mrf.mxu0
        %v1002 = vadd.f32 0.0, %v1001
        %1003 = vdwg.mxu0
        %v1005 = vsel %vm822, %v927, 0
        %1007 = vmatpush.msra.mxu0 0.0
        %1008 = vmatpush.msra.mxu0 0.0
        %1009 = vmatpush.msra.mxu0 0.0
        %1010 = vmatpush.msra.mxu0 0.0
        %1011 = vmatpush.msra.mxu0 0.0
        %1012 = vmatpush.msra.mxu0 0.0
        %1013 = vmatpush.msra.mxu0 0.0
        %1014 = vmatpush.msra.mxu0 0.0
        %1015 = vmatpush.msra.mxu0 0.0
        %1016 = vmatpush.msra.mxu0 0.0
        %1017 = vmatpush.msra.mxu0 0.0
        %1018 = vmatpush.msra.mxu0 0.0
        %1019 = vmatpush.msra.mxu0 0.0
        %1020 = vmatpush.msra.mxu0 0.0
        %1021 = vmatpush.msra.mxu0 %v407
        %1022 = vmatpush.msra.mxu0 %v406
        %1023 = vmatmul.f32.gmra.mxu0 %v1005
        %v1024 = vpop.f32.mrf.mxu0
        %v1025 = vadd.f32 0.0, %v1024
        %1026 = vdwg.mxu0
        %vm1027 = vcmask 55296
        %1028 = vst.msk [vmem:[%s187] sm:$0x7f] %vm1027, %v956
        %1029 = vst.msk [vmem:[%s187 + $0x8] sm:$0x7f] %vm1027, %v979
        %1030 = vst.msk [vmem:[%s187 + $0x10] sm:$0x7f] %vm1027, %v1002
        %1031 = vst.msk [vmem:[%s187 + $0x18] sm:$0x7f] %vm1027, %v1025
        %vm1033 = vcmask 1040384
        %v1034 = vrot.slane %v849, 7
        %v1035 = vrot.slane %v852, 7
        %v1036 = vsel %vm1033, %v1034, %v1035
        %v1037 = vsel %vm822, %v1036, 0
        %1039 = vmatpush.msra.mxu0 0.0
        %1040 = vmatpush.msra.mxu0 0.0
        %1041 = vmatpush.msra.mxu0 0.0
        %1042 = vmatpush.msra.mxu0 0.0
        %1043 = vmatpush.msra.mxu0 0.0
        %1044 = vmatpush.msra.mxu0 0.0
        %1045 = vmatpush.msra.mxu0 0.0
        %1046 = vmatpush.msra.mxu0 0.0
        %1047 = vmatpush.msra.mxu0 0.0
        %1048 = vmatpush.msra.mxu0 0.0
        %1049 = vmatpush.msra.mxu0 0.0
        %1050 = vmatpush.msra.mxu0 0.0
        %1051 = vmatpush.msra.mxu0 0.0
        %1052 = vmatpush.msra.mxu0 0.0
        %1053 = vmatpush.msra.mxu0 %v609
        %1054 = vmatpush.msra.mxu0 %v608
        %1055 = vmatmul.f32.gmra.mxu0 %v1037
        %v1056 = vpop.f32.mrf.mxu0
        %v1057 = vadd.f32 0.0, %v1056
        %1058 = vdwg.mxu0
        %v1060 = vrot.slane %v875, 7
        %v1061 = vrot.slane %v878, 7
        %v1062 = vsel %vm1033, %v1060, %v1061
        %v1063 = vsel %vm822, %v1062, 0
        %1065 = vmatpush.msra.mxu0 0.0
        %1066 = vmatpush.msra.mxu0 0.0
        %1067 = vmatpush.msra.mxu0 0.0
        %1068 = vmatpush.msra.mxu0 0.0
        %1069 = vmatpush.msra.mxu0 0.0
        %1070 = vmatpush.msra.mxu0 0.0
        %1071 = vmatpush.msra.mxu0 0.0
        %1072 = vmatpush.msra.mxu0 0.0
        %1073 = vmatpush.msra.mxu0 0.0
        %1074 = vmatpush.msra.mxu0 0.0
        %1075 = vmatpush.msra.mxu0 0.0
        %1076 = vmatpush.msra.mxu0 0.0
        %1077 = vmatpush.msra.mxu0 0.0
        %1078 = vmatpush.msra.mxu0 0.0
        %1079 = vmatpush.msra.mxu0 %v609
        %1080 = vmatpush.msra.mxu0 %v608
        %1081 = vmatmul.f32.gmra.mxu0 %v1063
        %v1082 = vpop.f32.mrf.mxu0
        %v1083 = vadd.f32 0.0, %v1082
        %1084 = vdwg.mxu0
        %v1086 = vrot.slane %v901, 7
        %v1087 = vrot.slane %v904, 7
        %v1088 = vsel %vm1033, %v1086, %v1087
        %v1089 = vsel %vm822, %v1088, 0
        %1091 = vmatpush.msra.mxu0 0.0
        %1092 = vmatpush.msra.mxu0 0.0
        %1093 = vmatpush.msra.mxu0 0.0
        %1094 = vmatpush.msra.mxu0 0.0
        %1095 = vmatpush.msra.mxu0 0.0
        %1096 = vmatpush.msra.mxu0 0.0
        %1097 = vmatpush.msra.mxu0 0.0
        %1098 = vmatpush.msra.mxu0 0.0
        %1099 = vmatpush.msra.mxu0 0.0
        %1100 = vmatpush.msra.mxu0 0.0
        %1101 = vmatpush.msra.mxu0 0.0
        %1102 = vmatpush.msra.mxu0 0.0
        %1103 = vmatpush.msra.mxu0 0.0
        %1104 = vmatpush.msra.mxu0 0.0
        %1105 = vmatpush.msra.mxu0 %v609
        %1106 = vmatpush.msra.mxu0 %v608
        %1107 = vmatmul.f32.gmra.mxu0 %v1089
        %v1108 = vpop.f32.mrf.mxu0
        %v1109 = vadd.f32 0.0, %v1108
        %1110 = vdwg.mxu0
        %v1112 = vrot.slane %v927, 7
        %v1113 = vrot.slane %v930, 7
        %v1114 = vsel %vm1033, %v1112, %v1113
        %v1115 = vsel %vm822, %v1114, 0
        %1117 = vmatpush.msra.mxu0 0.0
        %1118 = vmatpush.msra.mxu0 0.0
        %1119 = vmatpush.msra.mxu0 0.0
        %1120 = vmatpush.msra.mxu0 0.0
        %1121 = vmatpush.msra.mxu0 0.0
        %1122 = vmatpush.msra.mxu0 0.0
        %1123 = vmatpush.msra.mxu0 0.0
        %1124 = vmatpush.msra.mxu0 0.0
        %1125 = vmatpush.msra.mxu0 0.0
        %1126 = vmatpush.msra.mxu0 0.0
        %1127 = vmatpush.msra.mxu0 0.0
        %1128 = vmatpush.msra.mxu0 0.0
        %1129 = vmatpush.msra.mxu0 0.0
        %1130 = vmatpush.msra.mxu0 0.0
        %1131 = vmatpush.msra.mxu0 %v609
        %1132 = vmatpush.msra.mxu0 %v608
        %1133 = vmatmul.f32.gmra.mxu0 %v1115
        %v1134 = vpop.f32.mrf.mxu0
        %v1135 = vadd.f32 0.0, %v1134
        %1136 = vdwg.mxu0
        %s1137 = scalar_lea.vmem %s187, 32
        %1138 = vst.msk [vmem:[%s1137] sm:$0x7f] %vm1027, %v1057
        %1139 = vst.msk [vmem:[%s1137 + $0x8] sm:$0x7f] %vm1027, %v1083
        %1140 = vst.msk [vmem:[%s1137 + $0x10] sm:$0x7f] %vm1027, %v1109
        %1141 = vst.msk [vmem:[%s1137 + $0x18] sm:$0x7f] %vm1027, %v1135
        %vm1143 = vcmask 1041408
        %v1144 = vrot.slane %v852, 6
        %v1145 = vrot.slane %v855, 6
        %v1146 = vsel %vm1143, %v1144, %v1145
        %v1147 = vsel %vm822, %v1146, 0
        %1149 = vmatpush.msra.mxu0 0.0
        %1150 = vmatpush.msra.mxu0 0.0
        %1151 = vmatpush.msra.mxu0 0.0
        %1152 = vmatpush.msra.mxu0 0.0
        %1153 = vmatpush.msra.mxu0 0.0
        %1154 = vmatpush.msra.mxu0 0.0
        %1155 = vmatpush.msra.mxu0 0.0
        %1156 = vmatpush.msra.mxu0 0.0
        %1157 = vmatpush.msra.mxu0 0.0
        %1158 = vmatpush.msra.mxu0 0.0
        %1159 = vmatpush.msra.mxu0 0.0
        %1160 = vmatpush.msra.mxu0 0.0
        %1161 = vmatpush.msra.mxu0 0.0
        %1162 = vmatpush.msra.mxu0 0.0
        %1163 = vmatpush.msra.mxu0 %v811
        %1164 = vmatpush.msra.mxu0 %v810
        %1165 = vmatmul.f32.gmra.mxu0 %v1147
        %v1166 = vpop.f32.mrf.mxu0
        %v1167 = vadd.f32 0.0, %v1166
        %1168 = vdwg.mxu0
        %v1170 = vrot.slane %v878, 6
        %v1171 = vrot.slane %v881, 6
        %v1172 = vsel %vm1143, %v1170, %v1171
        %v1173 = vsel %vm822, %v1172, 0
        %1175 = vmatpush.msra.mxu0 0.0
        %1176 = vmatpush.msra.mxu0 0.0
        %1177 = vmatpush.msra.mxu0 0.0
        %1178 = vmatpush.msra.mxu0 0.0
        %1179 = vmatpush.msra.mxu0 0.0
        %1180 = vmatpush.msra.mxu0 0.0
        %1181 = vmatpush.msra.mxu0 0.0
        %1182 = vmatpush.msra.mxu0 0.0
        %1183 = vmatpush.msra.mxu0 0.0
        %1184 = vmatpush.msra.mxu0 0.0
        %1185 = vmatpush.msra.mxu0 0.0
        %1186 = vmatpush.msra.mxu0 0.0
        %1187 = vmatpush.msra.mxu0 0.0
        %1188 = vmatpush.msra.mxu0 0.0
        %1189 = vmatpush.msra.mxu0 %v811
        %1190 = vmatpush.msra.mxu0 %v810
        %1191 = vmatmul.f32.gmra.mxu0 %v1173
        %v1192 = vpop.f32.mrf.mxu0
        %v1193 = vadd.f32 0.0, %v1192
        %1194 = vdwg.mxu0
        %v1196 = vrot.slane %v904, 6
        %v1197 = vrot.slane %v907, 6
        %v1198 = vsel %vm1143, %v1196, %v1197
        %v1199 = vsel %vm822, %v1198, 0
        %1201 = vmatpush.msra.mxu0 0.0
        %1202 = vmatpush.msra.mxu0 0.0
        %1203 = vmatpush.msra.mxu0 0.0
        %1204 = vmatpush.msra.mxu0 0.0
        %1205 = vmatpush.msra.mxu0 0.0
        %1206 = vmatpush.msra.mxu0 0.0
        %1207 = vmatpush.msra.mxu0 0.0
        %1208 = vmatpush.msra.mxu0 0.0
        %1209 = vmatpush.msra.mxu0 0.0
        %1210 = vmatpush.msra.mxu0 0.0
        %1211 = vmatpush.msra.mxu0 0.0
        %1212 = vmatpush.msra.mxu0 0.0
        %1213 = vmatpush.msra.mxu0 0.0
        %1214 = vmatpush.msra.mxu0 0.0
        %1215 = vmatpush.msra.mxu0 %v811
        %1216 = vmatpush.msra.mxu0 %v810
        %1217 = vmatmul.f32.gmra.mxu0 %v1199
        %v1218 = vpop.f32.mrf.mxu0
        %v1219 = vadd.f32 0.0, %v1218
        %1220 = vdwg.mxu0
        %v1222 = vrot.slane %v930, 6
        %v1223 = vrot.slane %v933, 6
        %v1224 = vsel %vm1143, %v1222, %v1223
        %v1225 = vsel %vm822, %v1224, 0
        %1227 = vmatpush.msra.mxu0 0.0
        %1228 = vmatpush.msra.mxu0 0.0
        %1229 = vmatpush.msra.mxu0 0.0
        %1230 = vmatpush.msra.mxu0 0.0
        %1231 = vmatpush.msra.mxu0 0.0
        %1232 = vmatpush.msra.mxu0 0.0
        %1233 = vmatpush.msra.mxu0 0.0
        %1234 = vmatpush.msra.mxu0 0.0
        %1235 = vmatpush.msra.mxu0 0.0
        %1236 = vmatpush.msra.mxu0 0.0
        %1237 = vmatpush.msra.mxu0 0.0
        %1238 = vmatpush.msra.mxu0 0.0
        %1239 = vmatpush.msra.mxu0 0.0
        %1240 = vmatpush.msra.mxu0 0.0
        %1241 = vmatpush.msra.mxu0 %v811
        %1242 = vmatpush.msra.mxu0 %v810
        %1243 = vmatmul.f32.gmra.mxu0 %v1225
        %v1244 = vpop.f32.mrf.mxu0
        %v1245 = vadd.f32 0.0, %v1244
        %1246 = vdwg.mxu0
        %s1247 = scalar_lea.vmem %s187, 64
        %1248 = vst.msk [vmem:[%s1247] sm:$0x7f] %vm1027, %v1167
        %1249 = vst.msk [vmem:[%s1247 + $0x8] sm:$0x7f] %vm1027, %v1193
        %1250 = vst.msk [vmem:[%s1247 + $0x10] sm:$0x7f] %vm1027, %v1219
        %1251 = vst.msk [vmem:[%s1247 + $0x18] sm:$0x7f] %vm1027, %v1245
        %s1252 = smul.u32 3, %s35
        %s1253 = smul.u32 4, %s34
        %p1254 = scmp.lt.s32.totalorder %s1252, 8
        %s1255 = scalar_select %p1254, %s1252, 8
        %p1256 = scmp.lt.s32.totalorder %s1253, 3
        %s1257 = scalar_select %p1256, %s1253, 3
        %s1258 = smul.addr %s1255, 4
        %s1259 = sadd.s32 %s1257, %s1258
        %s1260 = smul.addr %s1259, 8
        %s1261 = scalar_lea.vmem %s3, %s1260
        // Predicated region
        $region29: #{tpu_custom_call.1} parent=23 // pred_check
          %p1262 = pneg %p92
        $region30: #{tpu_custom_call.1} parent=23 // pred_check_branch
          %1264 = sbr.rel (%p1262) target = $region32
        $region31: #{tpu_custom_call.1} parent=23 // pred_region
          %s1265 = smul.u32 3, %s35
          %s1266 = smul.u32 4, %s34
        $region32: #{tpu_custom_call.1} parent=23 // pred_fallthru
          _
      $region24: #{tpu_custom_call.1} parent=5 // pred_fallthru
        _
      %p1267 = scmp.le.s32.totalorder 2, %s25
      // Predicated region
      $region33: #{tpu_custom_call.1} parent=5 // pred_check
        %p1268 = pneg %p1267
      $region34: #{tpu_custom_call.1} parent=5 // pred_check_branch
        %1270 = sbr.rel (%p1268) target = $region36
      $region35: #{tpu_custom_call.1} parent=5 // pred_region
        %s1271 = ssub.s32 %s25, 2
        // Predicated region
        $region37: #{tpu_custom_call.1} parent=35 // pred_check
          %p1272 = pneg %p98
        $region38: #{tpu_custom_call.1} parent=35 // pred_check_branch
          %1274 = sbr.rel (%p1272) target = $region40
        $region39: #{tpu_custom_call.1} parent=35 // pred_region
          %s1275 = smul.u32 3, %s37
          %s1276 = smul.u32 4, %s36
          %p1277 = scmp.lt.s32.totalorder %s1275, 8
          %s1278 = scalar_select %p1277, %s1275, 8
          %p1279 = scmp.lt.s32.totalorder %s1276, 3
          %s1280 = scalar_select %p1279, %s1276, 3
          %s1281 = smul.addr %s1278, 4
          %s1282 = sadd.s32 %s1280, %s1281
          %s1283 = smul.addr %s1282, 8
          %s1284 = scalar_lea.vmem %s3, %s1283
        $region40: #{tpu_custom_call.1} parent=35 // pred_fallthru
          _
      $region36: #{tpu_custom_call.1} parent=5 // pred_fallthru
        _
    $region6: #{tpu_custom_call.1} parent=1 // loop_footer
      %s29 = sadd.s32 1, %s25
    $region7: #{tpu_custom_call.1} parent=1 // loop_footer_branch
      %24 = sbr.rel target = $region3
    $region8: #{tpu_custom_call.1} parent=1 // loop_exit
      _
    %1285 = vsyncpa [#allocation6], 1
    %s1286 = scalar_lea.sflag [#allocation6], 1
    %1287 = vsyncpa %s1286, 1

</llo_original>
